<compile_context>
chip_gen: v6e
topology: v6e:2x2x1
jax: 0.10.0
libtpu: 0.0.40
codegen_flags: <defaults>
</compile_context>

<pallas_src>
import functools
import math

import jax
import jax.numpy as jnp
from jax.experimental import pallas as pl
from jax.experimental.pallas import tpu as pltpu


# --------------------------------------------------------------------------------------
# Pallas kernels
# --------------------------------------------------------------------------------------
def _smooth_fold_kernel(x_ref, m_ref, o_ref, *, scale, num_classes):
    """Non-constant branch, lane-folded layout.

    x_ref/o_ref tile: (T, W) f32-castable, each row holds W // C samples of C classes.
    m_ref: (W, W) block-diagonal ones; `x @ m` broadcasts each sample's sum to its lanes.
    """
    c = float(num_classes)
    inv_c = 1.0 / c
    inv_cm1 = 1.0 / (c - 1.0)
    hi = jax.lax.Precision.HIGHEST

    x = x_ref[...].astype(jnp.float32)
    m = m_ref[...]

    a = jnp.abs(x)
    sum_a = jnp.dot(a, m, precision=hi, preferred_element_type=jnp.float32)
    d = a - sum_a * inv_c                                       # |r| - mean(|r|)
    sum_d2 = jnp.dot(d * d, m, precision=hi, preferred_element_type=jnp.float32)
    inv_std = jax.lax.rsqrt(sum_d2 * inv_cm1)                   # unbiased std (torch.std)
    w = scale * jax.nn.sigmoid(d * inv_std)
    sum_r = jnp.dot(x, m, precision=hi, preferred_element_type=jnp.float32)
    # weight_matrix @ r  ==  r + w * (sum(r) - C*r) / (C - 1)   (exact identity)
    o_ref[...] = (x + w * (sum_r - c * x) * inv_cm1).astype(o_ref.dtype)


def _smooth_rows_kernel(x_ref, o_ref, *, scale, num_classes):
    """Non-constant branch, fallback (B, C) layout (classes on lanes)."""
    c = float(num_classes)
    inv_c = 1.0 / c
    inv_cm1 = 1.0 / (c - 1.0)

    x = x_ref[...].astype(jnp.float32)
    a = jnp.abs(x)
    d = a - jnp.sum(a, axis=-1, keepdims=True) * inv_c
    inv_std = jax.lax.rsqrt(jnp.sum(d * d, axis=-1, keepdims=True) * inv_cm1)
    w = scale * jax.nn.sigmoid(d * inv_std)
    sum_r = jnp.sum(x, axis=-1, keepdims=True)
    o_ref[...] = (x + w * (sum_r - c * x) * inv_cm1).astype(o_ref.dtype)


def _const_fold_kernel(x_ref, m_ref, o_ref, *, lam_n, num_classes):
    """Constant branch, lane-folded: W^n r = mean(r) + lam^n * (r - mean(r))."""
    inv_c = 1.0 / float(num_classes)
    x = x_ref[...].astype(jnp.float32)
    mean = jnp.dot(x, m_ref[...], precision=jax.lax.Precision.HIGHEST,
                   preferred_element_type=jnp.float32) * inv_c
    o_ref[...] = (mean + lam_n * (x - mean)).astype(o_ref.dtype)


def _const_rows_kernel(x_ref, o_ref, *, lam_n, num_classes):
    """Constant branch, fallback (B, C) layout."""
    inv_c = 1.0 / float(num_classes)
    x = x_ref[...].astype(jnp.float32)
    mean = jnp.sum(x, axis=-1, keepdims=True) * inv_c
    o_ref[...] = (mean + lam_n * (x - mean)).astype(o_ref.dtype)


# --------------------------------------------------------------------------------------
# Module wrapper
# --------------------------------------------------------------------------------------
class LayerSmoothingFilterPallas:
    def __init__(self, num_layer, num_classes, scale, epoch, constant=False,
                 block_target_bytes=1 << 20):
        self.num_layer = int(num_layer)
        self.num_classes = int(num_classes)
        self.scale = float(scale)
        self.epoch = int(epoch)
        self.constant = bool(constant)
        self.block_target_bytes = int(block_target_bytes)
        # nn.Linear(num_classes, num_classes, bias=False) weight mirror; it is always
        # overwritten by put_weight before use, so a zero init is semantically equivalent.
        self.net_weight = jnp.zeros((self.num_classes, self.num_classes), jnp.float32)
        self._gsum_cache = {}

    # ----- helpers --------------------------------------------------------------------
    def _fold_factor(self, batch):
        """Samples folded per row so the lane width G*C is a multiple of 128."""
        c = self.num_classes
        g = 128 // math.gcd(c, 128)
        if g > 1 and g * c <= 1024 and batch % g == 0:
            return g
        return None

    def _group_sum_matrix(self, width):
        """(width, width) block-diagonal ones: x @ M broadcasts each C-group's sum."""
        if width not in self._gsum_cache:
            grp = jnp.arange(width, dtype=jnp.int32) // self.num_classes
            self._gsum_cache[width] = (grp[:, None] == grp[None, :]).astype(jnp.float32)
        return self._gsum_cache[width]

    def _pick_rows(self, nrows, lane_width):
        """Rows per block: ~block_target_bytes of f32, multiple of 8 (f32 sublane)."""
        if nrows <= 8:
            return nrows
        rows = self.block_target_bytes // max(1, lane_width * 4)
        rows = max(8, min(nrows, rows))
        return max(8, (rows // 8) * 8)

    @staticmethod
    def _compiler_params():
        return pltpu.CompilerParams(
            dimension_semantics=("parallel",),       # batch blocks shard across cores
            vmem_limit_bytes=32 * 1024 * 1024,       # well under physical on v5e/v6e/v7x
        )

    # ----- pallas_call drivers ----------------------------------------------------------
    def _run_folded(self, kernel_fn, residual, g, transcendentals):
        batch, c = residual.shape
        width = g * c                                # multiple of 128 -> lane-dense
        nrows = batch // g
        xf = residual.reshape(nrows, width)          # row-major reshape: no data movement
        msum = self._group_sum_matrix(width)
        tile_rows = self._pick_rows(nrows, width)
        grid = (pl.cdiv(nrows, tile_rows),)
        out = pl.pallas_call(
            kernel_fn,
            out_shape=jax.ShapeDtypeStruct((nrows, width), residual.dtype),
            grid=grid,
            in_specs=[
                pl.BlockSpec((tile_rows, width), lambda i: (i, 0)),
                pl.BlockSpec((width, width), lambda i: (0, 0)),   # fetched once, reused
            ],
            out_specs=pl.BlockSpec((tile_rows, width), lambda i: (i, 0)),
            compiler_params=self._compiler_params(),
            cost_estimate=pl.CostEstimate(
                flops=14 * batch * c + 6 * batch * c * width,
                transcendentals=transcendentals,
                bytes_accessed=2 * batch * c * 4 + width * width * 4),
        )(xf, msum)
        return out.reshape(batch, c)

    def _run_rows(self, kernel_fn, residual, transcendentals):
        batch, c = residual.shape
        lane_pad = ((c + 127) // 128) * 128          # VMEM pads the minor dim to 128
        tile_rows = self._pick_rows(batch, lane_pad)
        grid = (pl.cdiv(batch, tile_rows),)
        return pl.pallas_call(
            kernel_fn,
            out_shape=jax.ShapeDtypeStruct((batch, c), residual.dtype),
            grid=grid,
            in_specs=[pl.BlockSpec((tile_rows, c), lambda i: (i, 0))],
            out_specs=pl.BlockSpec((tile_rows, c), lambda i: (i, 0)),
            compiler_params=self._compiler_params(),
            cost_estimate=pl.CostEstimate(
                flops=16 * batch * c,
                transcendentals=transcendentals,
                bytes_accessed=2 * batch * c * 4),
        )(residual)

    # ----- forward ----------------------------------------------------------------------
    def forward(self, x, residual=None):
        if residual is None:
            residual = x
        batch, c = residual.shape
        assert c == self.num_classes

        if self.scale == 0:
            return residual

        g = self._fold_factor(batch)

        if self.constant:
            # Mirror put_weight(scale * ones(C)) side-effect (fixed, no-grad weight).
            eye = jnp.eye(c, dtype=jnp.float32)
            self.net_weight = eye + (self.scale / (c - 1.0)) * (
                jnp.ones((c, c), jnp.float32) - c * eye)
            lam_n = (1.0 - self.scale * c / (c - 1.0)) ** self.num_layer
            if g is not None:
                return self._run_folded(
                    functools.partial(_const_fold_kernel, lam_n=lam_n, num_classes=c),
                    residual, g, transcendentals=0)
            return self._run_rows(
                functools.partial(_const_rows_kernel, lam_n=lam_n, num_classes=c),
                residual, transcendentals=0)

        if g is not None:
            return self._run_folded(
                functools.partial(_smooth_fold_kernel, scale=self.scale, num_classes=c),
                residual, g, transcendentals=2 * batch * c)
        return self._run_rows(
            functools.partial(_smooth_rows_kernel, scale=self.scale, num_classes=c),
            residual, transcendentals=2 * batch * c)

    __call__ = forward


# --------------------------------------------------------------------------------------
# Pure-JAX references (mirror the PyTorch math exactly) + driver
# --------------------------------------------------------------------------------------
def _ref_nonconstant(r, scale):
    r = r.astype(jnp.float32)
    c = r.shape[-1]
    a = jnp.abs(r)
    mean = jnp.mean(a, axis=-1, keepdims=True)
    std = jnp.sqrt(jnp.sum((a - mean) ** 2, axis=-1, keepdims=True) / (c - 1))
    w = scale * jax.nn.sigmoid((a - mean) / std)
    eye = jnp.eye(c, dtype=jnp.float32)
    cmat = jnp.ones((c, c), jnp.float32) - c * eye
    wm = eye[None] + (1.0 / (c - 1)) * (w[..., None] * cmat[None])   # (B, C, C)
    return jnp.einsum("bij,bj->bi", wm, r, precision=jax.lax.Precision.HIGHEST)


def _ref_constant(r, scale, num_layer):
    r = r.astype(jnp.float32)
    c = r.shape[-1]
    eye = jnp.eye(c, dtype=jnp.float32)
    wm = eye + (scale / (c - 1)) * (jnp.ones((c, c), jnp.float32) - c * eye)
    y = r
    for _ in range(num_layer):
        y = jnp.dot(y, wm.T, precision=jax.lax.Precision.HIGHEST)
    return y


def _max_abs_diff(a, b):
    return float(jnp.max(jnp.abs(a.astype(jnp.float32) - b.astype(jnp.float32))))


if __name__ == "__main__":
    k0, k1 = jax.random.split(jax.random.PRNGKey(0))

    # --- lane-folded path: num_classes=16 divides 128 -> folded lane width 128 ---------
    B1, C1 = 1024, 16
    x1 = jax.random.normal(k0, (B1, C1), dtype=jnp.float32)

    smooth1 = LayerSmoothingFilterPallas(num_layer=3, num_classes=C1, scale=1.0, epoch=5,
                                         constant=False, block_target_bytes=16 * 1024)
    y1 = smooth1(x1)
    jax.block_until_ready(y1)
    assert y1.shape == (B1, C1)
    assert _max_abs_diff(y1, _ref_nonconstant(x1, 1.0)) < 1e-3

    const1 = LayerSmoothingFilterPallas(num_layer=3, num_classes=C1, scale=0.5, epoch=5,
                                        constant=True, block_target_bytes=16 * 1024)
    y1c = const1(x1)
    jax.block_until_ready(y1c)
    assert _max_abs_diff(y1c, _ref_constant(x1, 0.5, 3)) < 1e-3

    # --- fallback (B, C) path: batch not divisible by the fold factor ------------------
    B2, C2 = 96, 10
    x2 = jax.random.normal(k1, (B2, C2), dtype=jnp.float32)

    smooth2 = LayerSmoothingFilterPallas(num_layer=2, num_classes=C2, scale=0.7, epoch=5,
                                         constant=False, block_target_bytes=16 * 1024)
    y2 = smooth2(x2)
    jax.block_until_ready(y2)
    assert _max_abs_diff(y2, _ref_nonconstant(x2, 0.7)) < 1e-3

    const2 = LayerSmoothingFilterPallas(num_layer=2, num_classes=C2, scale=0.7, epoch=5,
                                        constant=True, block_target_bytes=16 * 1024)
    y2c = const2(x2)
    jax.block_until_ready(y2c)
    assert _max_abs_diff(y2c, _ref_constant(x2, 0.7, 2)) < 1e-3

    # --- scale == 0 -> identity ----------------------------------------------------------
    ident = LayerSmoothingFilterPallas(num_layer=3, num_classes=C1, scale=0.0, epoch=5)
    assert _max_abs_diff(ident(x1), x1) == 0.0

    print("KERNEL_OK")
</pallas_src>

<mosaic_0001>
module attributes {stable_mosaic.version = 11 : i64} {
  func.func @_smooth_fold_kernel(%arg0: i32, %arg1: memref<32x128xf32, #tpu.memory_space<vmem>>, %arg2: memref<128x128xf32, #tpu.memory_space<vmem>>, %arg3: memref<32x128xf32, #tpu.memory_space<vmem>>) attributes {dimension_semantics = [#tpu.dimension_semantics<parallel>], iteration_bounds = array<i64: 4>, scalar_prefetch = 0 : i64, scratch_operands = 0 : i64, tpu.core_type = #tpu.core_type<tc>, window_params = [{transform_indices = @transform_0, window_bounds = array<i64: 32, 128>}, {pipeline_mode = #tpu.pipeline_mode<synchronous>, transform_indices = @transform_1, window_bounds = array<i64: 128, 128>}, {transform_indices = @transform_2, window_bounds = array<i64: 32, 128>}]} {
    %c0 = arith.constant 0 : index
    %c0_0 = arith.constant 0 : index
    %0 = vector.load %arg1[%c0, %c0_0] : memref<32x128xf32, #tpu.memory_space<vmem>>, vector<32x128xf32>
    %c0_1 = arith.constant 0 : index
    %c0_2 = arith.constant 0 : index
    %1 = vector.load %arg2[%c0_1, %c0_2] : memref<128x128xf32, #tpu.memory_space<vmem>>, vector<128x128xf32>
    %2 = math.absf %0 : vector<32x128xf32>
    %cst = arith.constant dense<0.000000e+00> : vector<32x128xf32>
    %3 = tpu.matmul %2, %1, %cst {dimension_numbers = #tpu.dot_dimension_numbers<[1], [0], [0], [1], [0, 0, 1, 1], [], []>, precision = #tpu.contract_precision<fp32>} : vector<32x128xf32>, vector<128x128xf32>, vector<32x128xf32> -> vector<32x128xf32>
    %cst_3 = arith.constant 6.250000e-02 : f32
    %4 = vector.broadcast %cst_3 : f32 to vector<32x128xf32>
    %5 = arith.mulf %3, %4 : vector<32x128xf32>
    %6 = arith.subf %2, %5 : vector<32x128xf32>
    %7 = arith.mulf %6, %6 : vector<32x128xf32>
    %cst_4 = arith.constant dense<0.000000e+00> : vector<32x128xf32>
    %8 = tpu.matmul %7, %1, %cst_4 {dimension_numbers = #tpu.dot_dimension_numbers<[1], [0], [0], [1], [0, 0, 1, 1], [], []>, precision = #tpu.contract_precision<fp32>} : vector<32x128xf32>, vector<128x128xf32>, vector<32x128xf32> -> vector<32x128xf32>
    %cst_5 = arith.constant 0.0666666701 : f32
    %9 = vector.broadcast %cst_5 : f32 to vector<32x128xf32>
    %10 = arith.mulf %8, %9 : vector<32x128xf32>
    %11 = math.rsqrt %10 : vector<32x128xf32>
    %12 = arith.mulf %6, %11 : vector<32x128xf32>
    %13 = arith.negf %12 : vector<32x128xf32>
    %14 = math.exp %13 : vector<32x128xf32>
    %cst_6 = arith.constant 1.000000e+00 : f32
    %15 = vector.broadcast %cst_6 : f32 to vector<32x128xf32>
    %16 = arith.addf %15, %14 : vector<32x128xf32>
    %17 = arith.divf %15, %16 : vector<32x128xf32>
    %cst_7 = arith.constant 1.000000e+00 : f32
    %18 = vector.broadcast %cst_7 : f32 to vector<32x128xf32>
    %19 = arith.mulf %18, %17 : vector<32x128xf32>
    %cst_8 = arith.constant dense<0.000000e+00> : vector<32x128xf32>
    %20 = tpu.matmul %0, %1, %cst_8 {dimension_numbers = #tpu.dot_dimension_numbers<[1], [0], [0], [1], [0, 0, 1, 1], [], []>, precision = #tpu.contract_precision<fp32>} : vector<32x128xf32>, vector<128x128xf32>, vector<32x128xf32> -> vector<32x128xf32>
    %cst_9 = arith.constant 1.600000e+01 : f32
    %21 = vector.broadcast %cst_9 : f32 to vector<32x128xf32>
    %22 = arith.mulf %21, %0 : vector<32x128xf32>
    %23 = arith.subf %20, %22 : vector<32x128xf32>
    %24 = arith.mulf %19, %23 : vector<32x128xf32>
    %cst_10 = arith.constant 0.0666666701 : f32
    %25 = vector.broadcast %cst_10 : f32 to vector<32x128xf32>
    %26 = arith.mulf %24, %25 : vector<32x128xf32>
    %27 = arith.addf %0, %26 : vector<32x128xf32>
    %c0_11 = arith.constant 0 : index
    %c0_12 = arith.constant 0 : index
    %28 = vector.load %arg3[%c0_11, %c0_12] : memref<32x128xf32, #tpu.memory_space<vmem>>, vector<32x128xf32>
    tpu.vector_store %arg3[%c0_11, %c0_12], %27 {strides = array<i32>} : memref<32x128xf32, #tpu.memory_space<vmem>>, vector<32x128xf32>,
    return
  }
  func.func @transform_0(%arg0: i32) -> (i32, i32) {
    %c0_i32 = arith.constant 0 : i32
    %c0_i32_0 = arith.constant 0 : i32
    return %arg0, %c0_i32 : i32, i32
  }
  func.func @transform_1(%arg0: i32) -> (i32, i32) {
    %c0_i32 = arith.constant 0 : i32
    %c0_i32_0 = arith.constant 0 : i32
    %c0_i32_1 = arith.constant 0 : i32
    return %c0_i32, %c0_i32_0 : i32, i32
  }
  func.func @transform_2(%arg0: i32) -> (i32, i32) {
    %c0_i32 = arith.constant 0 : i32
    %c0_i32_0 = arith.constant 0 : i32
    return %arg0, %c0_i32 : i32, i32
  }
}

</mosaic_0001>

<llo_original>
// kernel: tpu_custom_call.1
$region0: #{tpu_custom_call.1}
  #allocation0 [shape = 'u32[]', space=smem, size = 0x4, offset = 0x4, fixed_abs, tag = 'smem constant byte address 0x4 - core index']
  #allocation1 [shape = 'u32[144,128]{1,0:T(1,128)}', space=vmem, size = 0x12000, scoped, tag = 'internal scratch']
  %s0 = inlined_call_operand.hbm [shape: f32[128,128], index: 0, kind: input, shape index: {}]
  %s1 = inlined_call_operand.hbm [shape: f32[128,128], index: 1, kind: input, shape index: {}]
  %s2 = inlined_call_operand.hbm [shape: f32[128,128], index: 2, kind: output, shape index: {}]
  %s3 = sld [smem:[#allocation0]]
  $region49: #{tpu_custom_call.1} parent=0
    _
  %s5 = ssub.s32 1, %s3
  %s6 = scalar_select 0, %s5, %s3
  $region1: #{tpu_custom_call.1} parent=0
    #allocation2 [shape = 'u8[32768]{0}', space=vmem, size = 0x8000, scoped, tag = 'input window, operand 0']
    #allocation3 [shape = 's32[2]{0}', space=sflag, size = 0x8, scoped, tag = 'scoped memory for tpu_custom_call.1']
    #allocation4 [shape = 's32[2]{0}', space=sflag, size = 0x8, scoped, tag = 'scoped memory for tpu_custom_call.1']
    #allocation5 [shape = 'u8[65536]{0}', space=vmem, size = 0x10000, scoped, tag = 'input window, operand 1, single buffered']
    #allocation6 [shape = 's32[1]{0}', space=sflag, size = 0x4, scoped, tag = 'scoped memory for tpu_custom_call.1']
    #allocation7 [shape = 'u8[32768]{0}', space=vmem, size = 0x8000, scoped, tag = 'output window, operand 0']
    %7 = vsyncpa [#allocation3], 0
    %s8 = scalar_lea.sflag [#allocation3], 1
    %9 = vsyncpa %s8, 0
    %10 = vsyncpa [#allocation6], 0
    %11 = vsyncpa [#allocation4], 0
    %s12 = scalar_lea.sflag [#allocation4], 1
    %13 = vsyncpa %s12, 0
    loop: start=0, step=1, limit=6
    $region2: #{tpu_custom_call.1} parent=1 // loop_pre_header
      _
    $region3: #{tpu_custom_call.1} parent=1 // loop_header
      %s15 = sphi 0, %s19
      %p16 = scmp.ge.s32.totalorder %s15, 6
      %s25 = sphi 0, %s27
      %s28 = sphi 0, %s25
      %s29 = sphi 0, %s28
      %s45 = sphi 0, %s29
      %s49 = sphi 0, %s49
      %s51 = sphi 0, %s49
      %s52 = sphi 0, %s51
      %s66 = sphi 0, %s52
      %s72 = sphi 0, %s74
      %s75 = sphi 0, %s72
      %s76 = sphi 0, %s75
      %s92 = sphi 0, %s76
    $region4: #{tpu_custom_call.1} parent=1 // loop_header_branch
      %18 = sbr.rel (%p16) target = $region8
    $region5: #{tpu_custom_call.1} parent=1 // loop_body
      %s20 = ssub.s32 %s15, 1
      %s21 = ssub.s32 %s15, 2
      %s22 = sadd.s32 %s15, 1
      %s23 = ssub.s32 %s15, %s22
      %p24 = scmp.eq.s32.totalorder %s23, 0
      %s26 = sadd.s32 %s25, 1
      %s27 = scalar_select %p24, %s25, %s26
      %p30 = pneg %p24
      %p31 = scmp.eq.s32.totalorder %s15, 3
      %p32 = por %p30, %p31
      %p33 = scmp.ne.s32.totalorder %s25, %s28
      %p34 = scmp.eq.s32.totalorder %s15, 0
      %p35 = por %p33, %p34
      %p36 = scmp.ne.s32.totalorder %s25, %s28
      %p37 = scmp.eq.s32.totalorder %s20, 3
      %p38 = por %p36, %p37
      %p39 = scmp.ne.s32.totalorder %s28, %s29
      %p40 = scmp.eq.s32.totalorder %s20, 0
      %p41 = por %p39, %p40
      %p42 = scmp.ne.s32.totalorder %s28, %s29
      %p43 = scmp.eq.s32.totalorder %s21, 3
      %p44 = por %p42, %p43
      %p46 = scmp.ne.s32.totalorder %s29, %s45
      %p47 = scmp.eq.s32.totalorder %s21, 0
      %p48 = por %p46, %p47
      %s50 = sadd.s32 %s49, 1
      %p53 = scmp.eq.s32.totalorder %s15, 3
      %p54 = scmp.ne.s32.totalorder %s49, %s51
      %p55 = scmp.eq.s32.totalorder %s15, 0
      %p56 = por %p54, %p55
      %p57 = scmp.ne.s32.totalorder %s49, %s51
      %p58 = scmp.eq.s32.totalorder %s20, 3
      %p59 = por %p57, %p58
      %p60 = scmp.ne.s32.totalorder %s51, %s52
      %p61 = scmp.eq.s32.totalorder %s20, 0
      %p62 = por %p60, %p61
      %p63 = scmp.ne.s32.totalorder %s51, %s52
      %p64 = scmp.eq.s32.totalorder %s21, 3
      %p65 = por %p63, %p64
      %p67 = scmp.ne.s32.totalorder %s52, %s66
      %p68 = scmp.eq.s32.totalorder %s21, 0
      %p69 = por %p67, %p68
      %s70 = ssub.s32 %s15, %s22
      %p71 = scmp.eq.s32.totalorder %s70, 0
      %s73 = sadd.s32 %s72, 1
      %s74 = scalar_select %p71, %s72, %s73
      %p77 = pneg %p71
      %p78 = scmp.eq.s32.totalorder %s15, 3
      %p79 = por %p77, %p78
      %p80 = scmp.ne.s32.totalorder %s72, %s75
      %p81 = scmp.eq.s32.totalorder %s15, 0
      %p82 = por %p80, %p81
      %p83 = scmp.ne.s32.totalorder %s72, %s75
      %p84 = scmp.eq.s32.totalorder %s20, 3
      %p85 = por %p83, %p84
      %p86 = scmp.ne.s32.totalorder %s75, %s76
      %p87 = scmp.eq.s32.totalorder %s20, 0
      %p88 = por %p86, %p87
      %p89 = scmp.ne.s32.totalorder %s75, %s76
      %p90 = scmp.eq.s32.totalorder %s21, 3
      %p91 = por %p89, %p90
      %p93 = scmp.ne.s32.totalorder %s76, %s92
      %p94 = scmp.eq.s32.totalorder %s21, 0
      %p95 = por %p93, %p94
      %p96 = scmp.le.s32.totalorder 1, %s15
      %p97 = scmp.lt.s32.totalorder %s15, 5
      %p98 = pnand %p96, %p97
      %p99 = pneg %p98
      // Predicated region
      $region9: #{tpu_custom_call.1} parent=5 // pred_check
        _
      $region10: #{tpu_custom_call.1} parent=5 // pred_check_branch
        %101 = sbr.rel (%p98) target = $region12
      $region11: #{tpu_custom_call.1} parent=5 // pred_region
        %s102 = ssub.s32 %s15, 1
        // Predicated region
        $region13: #{tpu_custom_call.1} parent=11 // pred_check
          %p103 = pneg %p62
        $region14: #{tpu_custom_call.1} parent=11 // pred_check_branch
          %105 = sbr.rel (%p103) target = $region16
        $region15: #{tpu_custom_call.1} parent=11 // pred_region
          %s107 = ssub.s32 2048, 2048
          %108 = vsyncadd [#allocation6], %s107
          %s109 = sshll.u32 [#allocation5], 4
          %s110 = int_to_ptr.vmem [resolvable:$true] %s109
          %115 = dma.hbm_to_vmem [thread:$0]  %s1, 2048, %s110, [#allocation6], 128, 128, 8
        $region16: #{tpu_custom_call.1} parent=11 // pred_fallthru
          _
      $region12: #{tpu_custom_call.1} parent=5 // pred_fallthru
        _
      %p116 = scmp.lt.s32.totalorder %s15, 4
      // Predicated region
      $region17: #{tpu_custom_call.1} parent=5 // pred_check
        %p117 = pneg %p116
      $region18: #{tpu_custom_call.1} parent=5 // pred_check_branch
        %119 = sbr.rel (%p117) target = $region20
      $region19: #{tpu_custom_call.1} parent=5 // pred_region
        // Predicated region
        $region21: #{tpu_custom_call.1} parent=19 // pred_check
          %p120 = pneg %p35
        $region22: #{tpu_custom_call.1} parent=19 // pred_check_branch
          %122 = sbr.rel (%p120) target = $region24
        $region23: #{tpu_custom_call.1} parent=19 // pred_region
          %s123 = sand.u32 %s25, 1
          %s124 = scalar_lea.sflag [#allocation3], %s123
          %s125 = sand.u32 %s25, 1
          %s126 = smul.addr %s125, 32
          %s127 = scalar_lea.vmem [#allocation2], %s126
          %s128 = smul.u32 4, %s15
          %s130 = ssub.s32 512, 512
          %131 = vsyncadd %s124, %s130
          %s132 = smul.addr %s128, 128
          %s133 = scalar_lea.hbm %s0, %s132
          %s134 = sshll.u32 %s127, 4
          %s135 = int_to_ptr.vmem [resolvable:$true] %s134
          %140 = dma.hbm_to_vmem [thread:$0]  %s133, 512, %s135, %s124, 128, 128, 8
        $region24: #{tpu_custom_call.1} parent=19 // pred_fallthru
          _
      $region20: #{tpu_custom_call.1} parent=5 // pred_fallthru
        _
      %p141 = scmp.le.s32.totalorder 1, %s15
      %p142 = scmp.lt.s32.totalorder %s15, 5
      %p143 = pnand %p141, %p142
      %p144 = pneg %p143
      // Predicated region
      $region25: #{tpu_custom_call.1} parent=5 // pred_check
        _
      $region26: #{tpu_custom_call.1} parent=5 // pred_check_branch
        %146 = sbr.rel (%p143) target = $region28
      $region27: #{tpu_custom_call.1} parent=5 // pred_region
        %s147 = ssub.s32 %s15, 1
        %s148 = sand.u32 %s28, 1
        %s149 = scalar_lea.sflag [#allocation3], %s148
        %s150 = sand.u32 %s28, 1
        %s151 = smul.addr %s150, 32
        %s152 = scalar_lea.vmem [#allocation2], %s151
        // Predicated region
        $region29: #{tpu_custom_call.1} parent=27 // pred_check
          %p153 = pneg %p41
        $region30: #{tpu_custom_call.1} parent=27 // pred_check_branch
          %155 = sbr.rel (%p153) target = $region32
        $region31: #{tpu_custom_call.1} parent=27 // pred_region
          %156 = dma.done %s149, 512
        $region32: #{tpu_custom_call.1} parent=27 // pred_fallthru
          _
        // Predicated region
        $region33: #{tpu_custom_call.1} parent=27 // pred_check
          %p157 = pneg %p62
        $region34: #{tpu_custom_call.1} parent=27 // pred_check_branch
          %159 = sbr.rel (%p157) target = $region36
        $region35: #{tpu_custom_call.1} parent=27 // pred_region
          %160 = dma.done [#allocation6], 2048
        $region36: #{tpu_custom_call.1} parent=27 // pred_fallthru
          _
        %s161 = sand.u32 %s28, 1
        %s162 = scalar_lea.sflag [#allocation3], %s161
        %s163 = sand.u32 %s28, 1
        %s164 = smul.addr %s163, 32
        %s165 = scalar_lea.vmem [#allocation2], %s164
        %p166 = pneg %p41
        %p167 = pneg %p38
        %p168 = pneg %p62
        %p169 = pneg %p59
        %p170 = pneg %p88
        %p171 = pneg %p85
        %s172 = sand.u32 %s75, 1
        %s173 = scalar_lea.sflag [#allocation4], %s172
        %s174 = sand.u32 %s75, 1
        %s175 = smul.addr %s174, 32
        %s176 = scalar_lea.vmem [#allocation7], %s175
        %s177 = smul.u32 4, %s20
        %s178 = smul.u32 4, %s20
        %v179 = vld [vmem:[%s152] sm:$0xff]
        %v180 = vld [vmem:[%s152 + $0x8] sm:$0xff]
        %v181 = vld [vmem:[%s152 + $0x10] sm:$0xff]
        %v182 = vld [vmem:[%s152 + $0x18] sm:$0xff]
        %v183 = vld [vmem:[#allocation5] sm:$0xff]
        %v184 = vld [vmem:[#allocation5 + $0x8] sm:$0xff]
        %v185 = vld [vmem:[#allocation5 + $0x10] sm:$0xff]
        %v186 = vld [vmem:[#allocation5 + $0x18] sm:$0xff]
        %v187 = vld [vmem:[#allocation5 + $0x20] sm:$0xff]
        %v188 = vld [vmem:[#allocation5 + $0x28] sm:$0xff]
        %v189 = vld [vmem:[#allocation5 + $0x30] sm:$0xff]
        %v190 = vld [vmem:[#allocation5 + $0x38] sm:$0xff]
        %v191 = vld [vmem:[#allocation5 + $0x40] sm:$0xff]
        %v192 = vld [vmem:[#allocation5 + $0x48] sm:$0xff]
        %v193 = vld [vmem:[#allocation5 + $0x50] sm:$0xff]
        %v194 = vld [vmem:[#allocation5 + $0x58] sm:$0xff]
        %v195 = vld [vmem:[#allocation5 + $0x60] sm:$0xff]
        %v196 = vld [vmem:[#allocation5 + $0x68] sm:$0xff]
        %v197 = vld [vmem:[#allocation5 + $0x70] sm:$0xff]
        %v198 = vld [vmem:[#allocation5 + $0x78] sm:$0xff]
        %v199 = vand.u32 2147483647, %v179
        %v200 = vand.u32 2147483647, %v180
        %v201 = vand.u32 2147483647, %v181
        %v202 = vand.u32 2147483647, %v182
        %203 = vmatprep.subr.mxu0 0.0
        %v204 = vand.u32 %v198, 4294901760
        %205 = vmatpush1.msra.mxu0 %v204
        %206 = vmatprep.subr.mxu0 0.0
        %v207 = vand.u32 %v197, 4294901760
        %208 = vmatpush1.msra.mxu0 %v207
        %209 = vmatprep.subr.mxu0 0.0
        %v210 = vand.u32 %v196, 4294901760
        %211 = vmatpush1.msra.mxu0 %v210
        %212 = vmatprep.subr.mxu0 0.0
        %v213 = vand.u32 %v195, 4294901760
        %214 = vmatpush1.msra.mxu0 %v213
        %215 = vmatprep.subr.mxu0 0.0
        %v216 = vand.u32 %v194, 4294901760
        %217 = vmatpush1.msra.mxu0 %v216
        %218 = vmatprep.subr.mxu0 0.0
        %v219 = vand.u32 %v193, 4294901760
        %220 = vmatpush1.msra.mxu0 %v219
        %221 = vmatprep.subr.mxu0 0.0
        %v222 = vand.u32 %v192, 4294901760
        %223 = vmatpush1.msra.mxu0 %v222
        %224 = vmatprep.subr.mxu0 0.0
        %v225 = vand.u32 %v191, 4294901760
        %226 = vmatpush1.msra.mxu0 %v225
        %227 = vmatprep.subr.mxu0 0.0
        %v228 = vand.u32 %v190, 4294901760
        %229 = vmatpush1.msra.mxu0 %v228
        %230 = vmatprep.subr.mxu0 0.0
        %v231 = vand.u32 %v189, 4294901760
        %232 = vmatpush1.msra.mxu0 %v231
        %233 = vmatprep.subr.mxu0 0.0
        %v234 = vand.u32 %v188, 4294901760
        %235 = vmatpush1.msra.mxu0 %v234
        %236 = vmatprep.subr.mxu0 0.0
        %v237 = vand.u32 %v187, 4294901760
        %238 = vmatpush1.msra.mxu0 %v237
        %239 = vmatprep.subr.mxu0 0.0
        %v240 = vand.u32 %v186, 4294901760
        %241 = vmatpush1.msra.mxu0 %v240
        %242 = vmatprep.subr.mxu0 0.0
        %v243 = vand.u32 %v185, 4294901760
        %244 = vmatpush1.msra.mxu0 %v243
        %245 = vmatprep.subr.mxu0 0.0
        %v246 = vand.u32 %v184, 4294901760
        %247 = vmatpush1.msra.mxu0 %v246
        %248 = vmatprep.subr.mxu0 0.0
        %v249 = vand.u32 %v183, 4294901760
        %250 = vmatpush1.msra.mxu0 %v249
        %251 = vmatprep.subr.mxu0 0.0
        %252 = vmatpush2.msra.mxu0 0.0
        %253 = vmatprep.subr.mxu0 0.0
        %254 = vmatpush2.msra.mxu0 0.0
        %255 = vmatprep.subr.mxu0 0.0
        %256 = vmatpush2.msra.mxu0 0.0
        %257 = vmatprep.subr.mxu0 0.0
        %258 = vmatpush2.msra.mxu0 0.0
        %259 = vmatprep.subr.mxu0 0.0
        %260 = vmatpush2.msra.mxu0 0.0
        %261 = vmatprep.subr.mxu0 0.0
        %262 = vmatpush2.msra.mxu0 0.0
        %263 = vmatprep.subr.mxu0 0.0
        %264 = vmatpush2.msra.mxu0 0.0
        %265 = vmatprep.subr.mxu0 0.0
        %266 = vmatpush2.msra.mxu0 0.0
        %267 = vmatprep.subr.mxu0 0.0
        %268 = vmatpush2.msra.mxu0 0.0
        %269 = vmatprep.subr.mxu0 0.0
        %270 = vmatpush2.msra.mxu0 0.0
        %271 = vmatprep.subr.mxu0 0.0
        %272 = vmatpush2.msra.mxu0 0.0
        %273 = vmatprep.subr.mxu0 0.0
        %274 = vmatpush2.msra.mxu0 0.0
        %275 = vmatprep.subr.mxu0 0.0
        %276 = vmatpush2.msra.mxu0 0.0
        %277 = vmatprep.subr.mxu0 0.0
        %278 = vmatpush2.msra.mxu0 0.0
        %279 = vmatprep.subr.mxu0 0.0
        %280 = vmatpush2.msra.mxu0 0.0
        %281 = vmatprep.subr.mxu0 0.0
        %282 = vmatpush2.msra.mxu0 0.0
        %283 = vmatprep.mubr.f32.mxu0 0.0
        %v284 = vand.u32 %v199, 4294901760
        %v285 = vsub.f32 %v199, %v284
        %v286 = vand.u32 %v285, 4294901760
        %v287 = vsub.f32 %v285, %v286
        %v288 = vand.u32 %v287, 4294901760
        %289 = vmatmul.mubr.f32.gmra.mxu0 %v288
        %v290 = vpop.f32.mrf.mxu0
        %v291 = vadd.f32 0.0, %v290
        %v292 = vpop.f32.mrf.mxu0
        %293 = vmatprep.mubr.f32.mxu0 0.0
        %v294 = vand.u32 %v200, 4294901760
        %v295 = vsub.f32 %v200, %v294
        %v296 = vand.u32 %v295, 4294901760
        %v297 = vsub.f32 %v295, %v296
        %v298 = vand.u32 %v297, 4294901760
        %299 = vmatmul.mubr.f32.gmra.mxu0 %v298
        %v300 = vpop.f32.mrf.mxu0
        %v301 = vadd.f32 0.0, %v300
        %v302 = vpop.f32.mrf.mxu0
        %303 = vmatprep.mubr.f32.mxu0 0.0
        %v304 = vand.u32 %v201, 4294901760
        %v305 = vsub.f32 %v201, %v304
        %v306 = vand.u32 %v305, 4294901760
        %v307 = vsub.f32 %v305, %v306
        %v308 = vand.u32 %v307, 4294901760
        %309 = vmatmul.mubr.f32.gmra.mxu0 %v308
        %v310 = vpop.f32.mrf.mxu0
        %v311 = vadd.f32 0.0, %v310
        %v312 = vpop.f32.mrf.mxu0
        %313 = vmatprep.mubr.f32.mxu0 0.0
        %v314 = vand.u32 %v202, 4294901760
        %v315 = vsub.f32 %v202, %v314
        %v316 = vand.u32 %v315, 4294901760
        %v317 = vsub.f32 %v315, %v316
        %v318 = vand.u32 %v317, 4294901760
        %319 = vmatmul.mubr.f32.gmra.mxu0 %v318
        %v320 = vpop.f32.mrf.mxu0
        %v321 = vadd.f32 0.0, %v320
        %v322 = vpop.f32.mrf.mxu0
        %323 = vdwg.mxu0
        %324 = vmatprep.subr.mxu0 0.0
        %v325 = vand.u32 %v198, 4294901760
        %v326 = vsub.f32 %v198, %v325
        %v327 = vand.u32 %v326, 4294901760
        %v328 = vsub.f32 %v326, %v327
        %v329 = vand.u32 %v328, 4294901760
        %330 = vmatpush1.msra.mxu0 %v329
        %331 = vmatprep.subr.mxu0 0.0
        %v332 = vand.u32 %v197, 4294901760
        %v333 = vsub.f32 %v197, %v332
        %v334 = vand.u32 %v333, 4294901760
        %v335 = vsub.f32 %v333, %v334
        %v336 = vand.u32 %v335, 4294901760
        %337 = vmatpush1.msra.mxu0 %v336
        %338 = vmatprep.subr.mxu0 0.0
        %v339 = vand.u32 %v196, 4294901760
        %v340 = vsub.f32 %v196, %v339
        %v341 = vand.u32 %v340, 4294901760
        %v342 = vsub.f32 %v340, %v341
        %v343 = vand.u32 %v342, 4294901760
        %344 = vmatpush1.msra.mxu0 %v343
        %345 = vmatprep.subr.mxu0 0.0
        %v346 = vand.u32 %v195, 4294901760
        %v347 = vsub.f32 %v195, %v346
        %v348 = vand.u32 %v347, 4294901760
        %v349 = vsub.f32 %v347, %v348
        %v350 = vand.u32 %v349, 4294901760
        %351 = vmatpush1.msra.mxu0 %v350
        %352 = vmatprep.subr.mxu0 0.0
        %v353 = vand.u32 %v194, 4294901760
        %v354 = vsub.f32 %v194, %v353
        %v355 = vand.u32 %v354, 4294901760
        %v356 = vsub.f32 %v354, %v355
        %v357 = vand.u32 %v356, 4294901760
        %358 = vmatpush1.msra.mxu0 %v357
        %359 = vmatprep.subr.mxu0 0.0
        %v360 = vand.u32 %v193, 4294901760
        %v361 = vsub.f32 %v193, %v360
        %v362 = vand.u32 %v361, 4294901760
        %v363 = vsub.f32 %v361, %v362
        %v364 = vand.u32 %v363, 4294901760
        %365 = vmatpush1.msra.mxu0 %v364
        %366 = vmatprep.subr.mxu0 0.0
        %v367 = vand.u32 %v192, 4294901760
        %v368 = vsub.f32 %v192, %v367
        %v369 = vand.u32 %v368, 4294901760
        %v370 = vsub.f32 %v368, %v369
        %v371 = vand.u32 %v370, 4294901760
        %372 = vmatpush1.msra.mxu0 %v371
        %373 = vmatprep.subr.mxu0 0.0
        %v374 = vand.u32 %v191, 4294901760
        %v375 = vsub.f32 %v191, %v374
        %v376 = vand.u32 %v375, 4294901760
        %v377 = vsub.f32 %v375, %v376
        %v378 = vand.u32 %v377, 4294901760
        %379 = vmatpush1.msra.mxu0 %v378
        %380 = vmatprep.subr.mxu0 0.0
        %v381 = vand.u32 %v190, 4294901760
        %v382 = vsub.f32 %v190, %v381
        %v383 = vand.u32 %v382, 4294901760
        %v384 = vsub.f32 %v382, %v383
        %v385 = vand.u32 %v384, 4294901760
        %386 = vmatpush1.msra.mxu0 %v385
        %387 = vmatprep.subr.mxu0 0.0
        %v388 = vand.u32 %v189, 4294901760
        %v389 = vsub.f32 %v189, %v388
        %v390 = vand.u32 %v389, 4294901760
        %v391 = vsub.f32 %v389, %v390
        %v392 = vand.u32 %v391, 4294901760
        %393 = vmatpush1.msra.mxu0 %v392
        %394 = vmatprep.subr.mxu0 0.0
        %v395 = vand.u32 %v188, 4294901760
        %v396 = vsub.f32 %v188, %v395
        %v397 = vand.u32 %v396, 4294901760
        %v398 = vsub.f32 %v396, %v397
        %v399 = vand.u32 %v398, 4294901760
        %400 = vmatpush1.msra.mxu0 %v399
        %401 = vmatprep.subr.mxu0 0.0
        %v402 = vand.u32 %v187, 4294901760
        %v403 = vsub.f32 %v187, %v402
        %v404 = vand.u32 %v403, 4294901760
        %v405 = vsub.f32 %v403, %v404
        %v406 = vand.u32 %v405, 4294901760
        %407 = vmatpush1.msra.mxu0 %v406
        %408 = vmatprep.subr.mxu0 0.0
        %v409 = vand.u32 %v186, 4294901760
        %v410 = vsub.f32 %v186, %v409
        %v411 = vand.u32 %v410, 4294901760
        %v412 = vsub.f32 %v410, %v411
        %v413 = vand.u32 %v412, 4294901760
        %414 = vmatpush1.msra.mxu0 %v413
        %415 = vmatprep.subr.mxu0 0.0
        %v416 = vand.u32 %v185, 4294901760
        %v417 = vsub.f32 %v185, %v416
        %v418 = vand.u32 %v417, 4294901760
        %v419 = vsub.f32 %v417, %v418
        %v420 = vand.u32 %v419, 4294901760
        %421 = vmatpush1.msra.mxu0 %v420
        %422 = vmatprep.subr.mxu0 0.0
        %v423 = vand.u32 %v184, 4294901760
        %v424 = vsub.f32 %v184, %v423
        %v425 = vand.u32 %v424, 4294901760
        %v426 = vsub.f32 %v424, %v425
        %v427 = vand.u32 %v426, 4294901760
        %428 = vmatpush1.msra.mxu0 %v427
        %429 = vmatprep.subr.mxu0 0.0
        %v430 = vand.u32 %v183, 4294901760
        %v431 = vsub.f32 %v183, %v430
        %v432 = vand.u32 %v431, 4294901760
        %v433 = vsub.f32 %v431, %v432
        %v434 = vand.u32 %v433, 4294901760
        %435 = vmatpush1.msra.mxu0 %v434
        %436 = vmatprep.subr.mxu0 0.0
        %437 = vmatpush2.msra.mxu0 0.0
        %438 = vmatprep.subr.mxu0 0.0
        %439 = vmatpush2.msra.mxu0 0.0
        %440 = vmatprep.subr.mxu0 0.0
        %441 = vmatpush2.msra.mxu0 0.0
        %442 = vmatprep.subr.mxu0 0.0
        %443 = vmatpush2.msra.mxu0 0.0
        %444 = vmatprep.subr.mxu0 0.0
        %445 = vmatpush2.msra.mxu0 0.0
        %446 = vmatprep.subr.mxu0 0.0
        %447 = vmatpush2.msra.mxu0 0.0
        %448 = vmatprep.subr.mxu0 0.0
        %449 = vmatpush2.msra.mxu0 0.0
        %450 = vmatprep.subr.mxu0 0.0
        %451 = vmatpush2.msra.mxu0 0.0
        %452 = vmatprep.subr.mxu0 0.0
        %453 = vmatpush2.msra.mxu0 0.0
        %454 = vmatprep.subr.mxu0 0.0
        %455 = vmatpush2.msra.mxu0 0.0
        %456 = vmatprep.subr.mxu0 0.0
        %457 = vmatpush2.msra.mxu0 0.0
        %458 = vmatprep.subr.mxu0 0.0
        %459 = vmatpush2.msra.mxu0 0.0
        %460 = vmatprep.subr.mxu0 0.0
        %461 = vmatpush2.msra.mxu0 0.0
        %462 = vmatprep.subr.mxu0 0.0
        %463 = vmatpush2.msra.mxu0 0.0
        %464 = vmatprep.subr.mxu0 0.0
        %465 = vmatpush2.msra.mxu0 0.0
        %466 = vmatprep.subr.mxu0 0.0
        %467 = vmatpush2.msra.mxu0 0.0
        %468 = vmatprep.mubr.f32.mxu0 0.0
        %v469 = vand.u32 %v199, 4294901760
        %470 = vmatmul.mubr.f32.gmra.mxu0 %v469
        %v471 = vpop.f32.mrf.mxu0
        %v472 = vadd.f32 %v291, %v471
        %v473 = vpop.f32.mrf.mxu0
        %474 = vmatprep.mubr.f32.mxu0 0.0
        %v475 = vand.u32 %v200, 4294901760
        %476 = vmatmul.mubr.f32.gmra.mxu0 %v475
        %v477 = vpop.f32.mrf.mxu0
        %v478 = vadd.f32 %v301, %v477
        %v479 = vpop.f32.mrf.mxu0
        %480 = vmatprep.mubr.f32.mxu0 0.0
        %v481 = vand.u32 %v201, 4294901760
        %482 = vmatmul.mubr.f32.gmra.mxu0 %v481
        %v483 = vpop.f32.mrf.mxu0
        %v484 = vadd.f32 %v311, %v483
        %v485 = vpop.f32.mrf.mxu0
        %486 = vmatprep.mubr.f32.mxu0 0.0
        %v487 = vand.u32 %v202, 4294901760
        %488 = vmatmul.mubr.f32.gmra.mxu0 %v487
        %v489 = vpop.f32.mrf.mxu0
        %v490 = vadd.f32 %v321, %v489
        %v491 = vpop.f32.mrf.mxu0
        %492 = vdwg.mxu0
        %493 = vmatprep.subr.mxu0 0.0
        %v494 = vand.u32 %v198, 4294901760
        %v495 = vsub.f32 %v198, %v494
        %496 = vmatpush1.msra.mxu0 %v495
        %497 = vmatprep.subr.mxu0 0.0
        %v498 = vand.u32 %v197, 4294901760
        %v499 = vsub.f32 %v197, %v498
        %500 = vmatpush1.msra.mxu0 %v499
        %501 = vmatprep.subr.mxu0 0.0
        %v502 = vand.u32 %v196, 4294901760
        %v503 = vsub.f32 %v196, %v502
        %504 = vmatpush1.msra.mxu0 %v503
        %505 = vmatprep.subr.mxu0 0.0
        %v506 = vand.u32 %v195, 4294901760
        %v507 = vsub.f32 %v195, %v506
        %508 = vmatpush1.msra.mxu0 %v507
        %509 = vmatprep.subr.mxu0 0.0
        %v510 = vand.u32 %v194, 4294901760
        %v511 = vsub.f32 %v194, %v510
        %512 = vmatpush1.msra.mxu0 %v511
        %513 = vmatprep.subr.mxu0 0.0
        %v514 = vand.u32 %v193, 4294901760
        %v515 = vsub.f32 %v193, %v514
        %516 = vmatpush1.msra.mxu0 %v515
        %517 = vmatprep.subr.mxu0 0.0
        %v518 = vand.u32 %v192, 4294901760
        %v519 = vsub.f32 %v192, %v518
        %520 = vmatpush1.msra.mxu0 %v519
        %521 = vmatprep.subr.mxu0 0.0
        %v522 = vand.u32 %v191, 4294901760
        %v523 = vsub.f32 %v191, %v522
        %524 = vmatpush1.msra.mxu0 %v523
        %525 = vmatprep.subr.mxu0 0.0
        %v526 = vand.u32 %v190, 4294901760
        %v527 = vsub.f32 %v190, %v526
        %528 = vmatpush1.msra.mxu0 %v527
        %529 = vmatprep.subr.mxu0 0.0
        %v530 = vand.u32 %v189, 4294901760
        %v531 = vsub.f32 %v189, %v530
        %532 = vmatpush1.msra.mxu0 %v531
        %533 = vmatprep.subr.mxu0 0.0
        %v534 = vand.u32 %v188, 4294901760
        %v535 = vsub.f32 %v188, %v534
        %536 = vmatpush1.msra.mxu0 %v535
        %537 = vmatprep.subr.mxu0 0.0
        %v538 = vand.u32 %v187, 4294901760
        %v539 = vsub.f32 %v187, %v538
        %540 = vmatpush1.msra.mxu0 %v539
        %541 = vmatprep.subr.mxu0 0.0
        %v542 = vand.u32 %v186, 4294901760
        %v543 = vsub.f32 %v186, %v542
        %544 = vmatpush1.msra.mxu0 %v543
        %545 = vmatprep.subr.mxu0 0.0
        %v546 = vand.u32 %v185, 4294901760
        %v547 = vsub.f32 %v185, %v546
        %548 = vmatpush1.msra.mxu0 %v547
        %549 = vmatprep.subr.mxu0 0.0
        %v550 = vand.u32 %v184, 4294901760
        %v551 = vsub.f32 %v184, %v550
        %552 = vmatpush1.msra.mxu0 %v551
        %553 = vmatprep.subr.mxu0 0.0
        %v554 = vand.u32 %v183, 4294901760
        %v555 = vsub.f32 %v183, %v554
        %556 = vmatpush1.msra.mxu0 %v555
        %557 = vmatprep.subr.mxu0 0.0
        %558 = vmatpush2.msra.mxu0 0.0
        %559 = vmatprep.subr.mxu0 0.0
        %560 = vmatpush2.msra.mxu0 0.0
        %561 = vmatprep.subr.mxu0 0.0
        %562 = vmatpush2.msra.mxu0 0.0
        %563 = vmatprep.subr.mxu0 0.0
        %564 = vmatpush2.msra.mxu0 0.0
        %565 = vmatprep.subr.mxu0 0.0
        %566 = vmatpush2.msra.mxu0 0.0
        %567 = vmatprep.subr.mxu0 0.0
        %568 = vmatpush2.msra.mxu0 0.0
        %569 = vmatprep.subr.mxu0 0.0
        %570 = vmatpush2.msra.mxu0 0.0
        %571 = vmatprep.subr.mxu0 0.0
        %572 = vmatpush2.msra.mxu0 0.0
        %573 = vmatprep.subr.mxu0 0.0
        %574 = vmatpush2.msra.mxu0 0.0
        %575 = vmatprep.subr.mxu0 0.0
        %576 = vmatpush2.msra.mxu0 0.0
        %577 = vmatprep.subr.mxu0 0.0
        %578 = vmatpush2.msra.mxu0 0.0
        %579 = vmatprep.subr.mxu0 0.0
        %580 = vmatpush2.msra.mxu0 0.0
        %581 = vmatprep.subr.mxu0 0.0
        %582 = vmatpush2.msra.mxu0 0.0
        %583 = vmatprep.subr.mxu0 0.0
        %584 = vmatpush2.msra.mxu0 0.0
        %585 = vmatprep.subr.mxu0 0.0
        %586 = vmatpush2.msra.mxu0 0.0
        %587 = vmatprep.subr.mxu0 0.0
        %588 = vmatpush2.msra.mxu0 0.0
        %589 = vmatprep.mubr.f32.mxu0 0.0
        %v590 = vand.u32 %v199, 4294901760
        %v591 = vsub.f32 %v199, %v590
        %592 = vmatmul.mubr.f32.gmra.mxu0 %v591
        %v593 = vpop.f32.mrf.mxu0
        %v594 = vadd.f32 %v472, %v593
        %v595 = vpop.f32.mrf.mxu0
        %596 = vmatprep.mubr.f32.mxu0 0.0
        %v597 = vand.u32 %v200, 4294901760
        %v598 = vsub.f32 %v200, %v597
        %599 = vmatmul.mubr.f32.gmra.mxu0 %v598
        %v600 = vpop.f32.mrf.mxu0
        %v601 = vadd.f32 %v478, %v600
        %v602 = vpop.f32.mrf.mxu0
        %603 = vmatprep.mubr.f32.mxu0 0.0
        %v604 = vand.u32 %v201, 4294901760
        %v605 = vsub.f32 %v201, %v604
        %606 = vmatmul.mubr.f32.gmra.mxu0 %v605
        %v607 = vpop.f32.mrf.mxu0
        %v608 = vadd.f32 %v484, %v607
        %v609 = vpop.f32.mrf.mxu0
        %610 = vmatprep.mubr.f32.mxu0 0.0
        %v611 = vand.u32 %v202, 4294901760
        %v612 = vsub.f32 %v202, %v611
        %613 = vmatmul.mubr.f32.gmra.mxu0 %v612
        %v614 = vpop.f32.mrf.mxu0
        %v615 = vadd.f32 %v490, %v614
        %v616 = vpop.f32.mrf.mxu0
        %617 = vdwg.mxu0
        %618 = vmatprep.subr.mxu0 0.0
        %v619 = vand.u32 %v198, 4294901760
        %620 = vmatpush1.msra.mxu0 %v619
        %621 = vmatprep.subr.mxu0 0.0
        %v622 = vand.u32 %v197, 4294901760
        %623 = vmatpush1.msra.mxu0 %v622
        %624 = vmatprep.subr.mxu0 0.0
        %v625 = vand.u32 %v196, 4294901760
        %626 = vmatpush1.msra.mxu0 %v625
        %627 = vmatprep.subr.mxu0 0.0
        %v628 = vand.u32 %v195, 4294901760
        %629 = vmatpush1.msra.mxu0 %v628
        %630 = vmatprep.subr.mxu0 0.0
        %v631 = vand.u32 %v194, 4294901760
        %632 = vmatpush1.msra.mxu0 %v631
        %633 = vmatprep.subr.mxu0 0.0
        %v634 = vand.u32 %v193, 4294901760
        %635 = vmatpush1.msra.mxu0 %v634
        %636 = vmatprep.subr.mxu0 0.0
        %v637 = vand.u32 %v192, 4294901760
        %638 = vmatpush1.msra.mxu0 %v637
        %639 = vmatprep.subr.mxu0 0.0
        %v640 = vand.u32 %v191, 4294901760
        %641 = vmatpush1.msra.mxu0 %v640
        %642 = vmatprep.subr.mxu0 0.0
        %v643 = vand.u32 %v190, 4294901760
        %644 = vmatpush1.msra.mxu0 %v643
        %645 = vmatprep.subr.mxu0 0.0
        %v646 = vand.u32 %v189, 4294901760
        %647 = vmatpush1.msra.mxu0 %v646
        %648 = vmatprep.subr.mxu0 0.0
        %v649 = vand.u32 %v188, 4294901760
        %650 = vmatpush1.msra.mxu0 %v649
        %651 = vmatprep.subr.mxu0 0.0
        %v652 = vand.u32 %v187, 4294901760
        %653 = vmatpush1.msra.mxu0 %v652
        %654 = vmatprep.subr.mxu0 0.0
        %v655 = vand.u32 %v186, 4294901760
        %656 = vmatpush1.msra.mxu0 %v655
        %657 = vmatprep.subr.mxu0 0.0
        %v658 = vand.u32 %v185, 4294901760
        %659 = vmatpush1.msra.mxu0 %v658
        %660 = vmatprep.subr.mxu0 0.0
        %v661 = vand.u32 %v184, 4294901760
        %662 = vmatpush1.msra.mxu0 %v661
        %663 = vmatprep.subr.mxu0 0.0
        %v664 = vand.u32 %v183, 4294901760
        %665 = vmatpush1.msra.mxu0 %v664
        %666 = vmatprep.subr.mxu0 0.0
        %667 = vmatpush2.msra.mxu0 0.0
        %668 = vmatprep.subr.mxu0 0.0
        %669 = vmatpush2.msra.mxu0 0.0
        %670 = vmatprep.subr.mxu0 0.0
        %671 = vmatpush2.msra.mxu0 0.0
        %672 = vmatprep.subr.mxu0 0.0
        %673 = vmatpush2.msra.mxu0 0.0
        %674 = vmatprep.subr.mxu0 0.0
        %675 = vmatpush2.msra.mxu0 0.0
        %676 = vmatprep.subr.mxu0 0.0
        %677 = vmatpush2.msra.mxu0 0.0
        %678 = vmatprep.subr.mxu0 0.0
        %679 = vmatpush2.msra.mxu0 0.0
        %680 = vmatprep.subr.mxu0 0.0
        %681 = vmatpush2.msra.mxu0 0.0
        %682 = vmatprep.subr.mxu0 0.0
        %683 = vmatpush2.msra.mxu0 0.0
        %684 = vmatprep.subr.mxu0 0.0
        %685 = vmatpush2.msra.mxu0 0.0
        %686 = vmatprep.subr.mxu0 0.0
        %687 = vmatpush2.msra.mxu0 0.0
        %688 = vmatprep.subr.mxu0 0.0
        %689 = vmatpush2.msra.mxu0 0.0
        %690 = vmatprep.subr.mxu0 0.0
        %691 = vmatpush2.msra.mxu0 0.0
        %692 = vmatprep.subr.mxu0 0.0
        %693 = vmatpush2.msra.mxu0 0.0
        %694 = vmatprep.subr.mxu0 0.0
        %695 = vmatpush2.msra.mxu0 0.0
        %696 = vmatprep.subr.mxu0 0.0
        %697 = vmatpush2.msra.mxu0 0.0
        %698 = vmatprep.mubr.f32.mxu0 0.0
        %v699 = vand.u32 %v199, 4294901760
        %v700 = vsub.f32 %v199, %v699
        %v701 = vand.u32 %v700, 4294901760
        %702 = vmatmul.mubr.f32.gmra.mxu0 %v701
        %v703 = vpop.f32.mrf.mxu0
        %v704 = vadd.f32 %v594, %v703
        %v705 = vpop.f32.mrf.mxu0
        %706 = vmatprep.mubr.f32.mxu0 0.0
        %v707 = vand.u32 %v200, 4294901760
        %v708 = vsub.f32 %v200, %v707
        %v709 = vand.u32 %v708, 4294901760
        %710 = vmatmul.mubr.f32.gmra.mxu0 %v709
        %v711 = vpop.f32.mrf.mxu0
        %v712 = vadd.f32 %v601, %v711
        %v713 = vpop.f32.mrf.mxu0
        %714 = vmatprep.mubr.f32.mxu0 0.0
        %v715 = vand.u32 %v201, 4294901760
        %v716 = vsub.f32 %v201, %v715
        %v717 = vand.u32 %v716, 4294901760
        %718 = vmatmul.mubr.f32.gmra.mxu0 %v717
        %v719 = vpop.f32.mrf.mxu0
        %v720 = vadd.f32 %v608, %v719
        %v721 = vpop.f32.mrf.mxu0
        %722 = vmatprep.mubr.f32.mxu0 0.0
        %v723 = vand.u32 %v202, 4294901760
        %v724 = vsub.f32 %v202, %v723
        %v725 = vand.u32 %v724, 4294901760
        %726 = vmatmul.mubr.f32.gmra.mxu0 %v725
        %v727 = vpop.f32.mrf.mxu0
        %v728 = vadd.f32 %v615, %v727
        %v729 = vpop.f32.mrf.mxu0
        %730 = vdwg.mxu0
        %731 = vmatprep.subr.mxu0 0.0
        %v732 = vand.u32 %v198, 4294901760
        %v733 = vsub.f32 %v198, %v732
        %v734 = vand.u32 %v733, 4294901760
        %735 = vmatpush1.msra.mxu0 %v734
        %736 = vmatprep.subr.mxu0 0.0
        %v737 = vand.u32 %v197, 4294901760
        %v738 = vsub.f32 %v197, %v737
        %v739 = vand.u32 %v738, 4294901760
        %740 = vmatpush1.msra.mxu0 %v739
        %741 = vmatprep.subr.mxu0 0.0
        %v742 = vand.u32 %v196, 4294901760
        %v743 = vsub.f32 %v196, %v742
        %v744 = vand.u32 %v743, 4294901760
        %745 = vmatpush1.msra.mxu0 %v744
        %746 = vmatprep.subr.mxu0 0.0
        %v747 = vand.u32 %v195, 4294901760
        %v748 = vsub.f32 %v195, %v747
        %v749 = vand.u32 %v748, 4294901760
        %750 = vmatpush1.msra.mxu0 %v749
        %751 = vmatprep.subr.mxu0 0.0
        %v752 = vand.u32 %v194, 4294901760
        %v753 = vsub.f32 %v194, %v752
        %v754 = vand.u32 %v753, 4294901760
        %755 = vmatpush1.msra.mxu0 %v754
        %756 = vmatprep.subr.mxu0 0.0
        %v757 = vand.u32 %v193, 4294901760
        %v758 = vsub.f32 %v193, %v757
        %v759 = vand.u32 %v758, 4294901760
        %760 = vmatpush1.msra.mxu0 %v759
        %761 = vmatprep.subr.mxu0 0.0
        %v762 = vand.u32 %v192, 4294901760
        %v763 = vsub.f32 %v192, %v762
        %v764 = vand.u32 %v763, 4294901760
        %765 = vmatpush1.msra.mxu0 %v764
        %766 = vmatprep.subr.mxu0 0.0
        %v767 = vand.u32 %v191, 4294901760
        %v768 = vsub.f32 %v191, %v767
        %v769 = vand.u32 %v768, 4294901760
        %770 = vmatpush1.msra.mxu0 %v769
        %771 = vmatprep.subr.mxu0 0.0
        %v772 = vand.u32 %v190, 4294901760
        %v773 = vsub.f32 %v190, %v772
        %v774 = vand.u32 %v773, 4294901760
        %775 = vmatpush1.msra.mxu0 %v774
        %776 = vmatprep.subr.mxu0 0.0
        %v777 = vand.u32 %v189, 4294901760
        %v778 = vsub.f32 %v189, %v777
        %v779 = vand.u32 %v778, 4294901760
        %780 = vmatpush1.msra.mxu0 %v779
        %781 = vmatprep.subr.mxu0 0.0
        %v782 = vand.u32 %v188, 4294901760
        %v783 = vsub.f32 %v188, %v782
        %v784 = vand.u32 %v783, 4294901760
        %785 = vmatpush1.msra.mxu0 %v784
        %786 = vmatprep.subr.mxu0 0.0
        %v787 = vand.u32 %v187, 4294901760
        %v788 = vsub.f32 %v187, %v787
        %v789 = vand.u32 %v788, 4294901760
        %790 = vmatpush1.msra.mxu0 %v789
        %791 = vmatprep.subr.mxu0 0.0
        %v792 = vand.u32 %v186, 4294901760
        %v793 = vsub.f32 %v186, %v792
        %v794 = vand.u32 %v793, 4294901760
        %795 = vmatpush1.msra.mxu0 %v794
        %796 = vmatprep.subr.mxu0 0.0
        %v797 = vand.u32 %v185, 4294901760
        %v798 = vsub.f32 %v185, %v797
        %v799 = vand.u32 %v798, 4294901760
        %800 = vmatpush1.msra.mxu0 %v799
        %801 = vmatprep.subr.mxu0 0.0
        %v802 = vand.u32 %v184, 4294901760
        %v803 = vsub.f32 %v184, %v802
        %v804 = vand.u32 %v803, 4294901760
        %805 = vmatpush1.msra.mxu0 %v804
        %806 = vmatprep.subr.mxu0 0.0
        %v807 = vand.u32 %v183, 4294901760
        %v808 = vsub.f32 %v183, %v807
        %v809 = vand.u32 %v808, 4294901760
        %810 = vmatpush1.msra.mxu0 %v809
        %811 = vmatprep.subr.mxu0 0.0
        %812 = vmatpush2.msra.mxu0 0.0
        %813 = vmatprep.subr.mxu0 0.0
        %814 = vmatpush2.msra.mxu0 0.0
        %815 = vmatprep.subr.mxu0 0.0
        %816 = vmatpush2.msra.mxu0 0.0
        %817 = vmatprep.subr.mxu0 0.0
        %818 = vmatpush2.msra.mxu0 0.0
        %819 = vmatprep.subr.mxu0 0.0
        %820 = vmatpush2.msra.mxu0 0.0
        %821 = vmatprep.subr.mxu0 0.0
        %822 = vmatpush2.msra.mxu0 0.0
        %823 = vmatprep.subr.mxu0 0.0
        %824 = vmatpush2.msra.mxu0 0.0
        %825 = vmatprep.subr.mxu0 0.0
        %826 = vmatpush2.msra.mxu0 0.0
        %827 = vmatprep.subr.mxu0 0.0
        %828 = vmatpush2.msra.mxu0 0.0
        %829 = vmatprep.subr.mxu0 0.0
        %830 = vmatpush2.msra.mxu0 0.0
        %831 = vmatprep.subr.mxu0 0.0
        %832 = vmatpush2.msra.mxu0 0.0
        %833 = vmatprep.subr.mxu0 0.0
        %834 = vmatpush2.msra.mxu0 0.0
        %835 = vmatprep.subr.mxu0 0.0
        %836 = vmatpush2.msra.mxu0 0.0
        %837 = vmatprep.subr.mxu0 0.0
        %838 = vmatpush2.msra.mxu0 0.0
        %839 = vmatprep.subr.mxu0 0.0
        %840 = vmatpush2.msra.mxu0 0.0
        %841 = vmatprep.subr.mxu0 0.0
        %842 = vmatpush2.msra.mxu0 0.0
        %843 = vmatprep.mubr.f32.mxu0 0.0
        %v844 = vand.u32 %v199, 4294901760
        %845 = vmatmul.mubr.f32.gmra.mxu0 %v844
        %v846 = vpop.f32.mrf.mxu0
        %v847 = vadd.f32 %v704, %v846
        %v848 = vpop.f32.mrf.mxu0
        %849 = vmatprep.mubr.f32.mxu0 0.0
        %v850 = vand.u32 %v200, 4294901760
        %851 = vmatmul.mubr.f32.gmra.mxu0 %v850
        %v852 = vpop.f32.mrf.mxu0
        %v853 = vadd.f32 %v712, %v852
        %v854 = vpop.f32.mrf.mxu0
        %855 = vmatprep.mubr.f32.mxu0 0.0
        %v856 = vand.u32 %v201, 4294901760
        %857 = vmatmul.mubr.f32.gmra.mxu0 %v856
        %v858 = vpop.f32.mrf.mxu0
        %v859 = vadd.f32 %v720, %v858
        %v860 = vpop.f32.mrf.mxu0
        %861 = vmatprep.mubr.f32.mxu0 0.0
        %v862 = vand.u32 %v202, 4294901760
        %863 = vmatmul.mubr.f32.gmra.mxu0 %v862
        %v864 = vpop.f32.mrf.mxu0
        %v865 = vadd.f32 %v728, %v864
        %v866 = vpop.f32.mrf.mxu0
        %867 = vdwg.mxu0
        %868 = vmatprep.subr.mxu0 0.0
        %v869 = vand.u32 %v198, 4294901760
        %870 = vmatpush1.msra.mxu0 %v869
        %871 = vmatprep.subr.mxu0 0.0
        %v872 = vand.u32 %v197, 4294901760
        %873 = vmatpush1.msra.mxu0 %v872
        %874 = vmatprep.subr.mxu0 0.0
        %v875 = vand.u32 %v196, 4294901760
        %876 = vmatpush1.msra.mxu0 %v875
        %877 = vmatprep.subr.mxu0 0.0
        %v878 = vand.u32 %v195, 4294901760
        %879 = vmatpush1.msra.mxu0 %v878
        %880 = vmatprep.subr.mxu0 0.0
        %v881 = vand.u32 %v194, 4294901760
        %882 = vmatpush1.msra.mxu0 %v881
        %883 = vmatprep.subr.mxu0 0.0
        %v884 = vand.u32 %v193, 4294901760
        %885 = vmatpush1.msra.mxu0 %v884
        %886 = vmatprep.subr.mxu0 0.0
        %v887 = vand.u32 %v192, 4294901760
        %888 = vmatpush1.msra.mxu0 %v887
        %889 = vmatprep.subr.mxu0 0.0
        %v890 = vand.u32 %v191, 4294901760
        %891 = vmatpush1.msra.mxu0 %v890
        %892 = vmatprep.subr.mxu0 0.0
        %v893 = vand.u32 %v190, 4294901760
        %894 = vmatpush1.msra.mxu0 %v893
        %895 = vmatprep.subr.mxu0 0.0
        %v896 = vand.u32 %v189, 4294901760
        %897 = vmatpush1.msra.mxu0 %v896
        %898 = vmatprep.subr.mxu0 0.0
        %v899 = vand.u32 %v188, 4294901760
        %900 = vmatpush1.msra.mxu0 %v899
        %901 = vmatprep.subr.mxu0 0.0
        %v902 = vand.u32 %v187, 4294901760
        %903 = vmatpush1.msra.mxu0 %v902
        %904 = vmatprep.subr.mxu0 0.0
        %v905 = vand.u32 %v186, 4294901760
        %906 = vmatpush1.msra.mxu0 %v905
        %907 = vmatprep.subr.mxu0 0.0
        %v908 = vand.u32 %v185, 4294901760
        %909 = vmatpush1.msra.mxu0 %v908
        %910 = vmatprep.subr.mxu0 0.0
        %v911 = vand.u32 %v184, 4294901760
        %912 = vmatpush1.msra.mxu0 %v911
        %913 = vmatprep.subr.mxu0 0.0
        %v914 = vand.u32 %v183, 4294901760
        %915 = vmatpush1.msra.mxu0 %v914
        %916 = vmatprep.subr.mxu0 0.0
        %917 = vmatpush2.msra.mxu0 0.0
        %918 = vmatprep.subr.mxu0 0.0
        %919 = vmatpush2.msra.mxu0 0.0
        %920 = vmatprep.subr.mxu0 0.0
        %921 = vmatpush2.msra.mxu0 0.0
        %922 = vmatprep.subr.mxu0 0.0
        %923 = vmatpush2.msra.mxu0 0.0
        %924 = vmatprep.subr.mxu0 0.0
        %925 = vmatpush2.msra.mxu0 0.0
        %926 = vmatprep.subr.mxu0 0.0
        %927 = vmatpush2.msra.mxu0 0.0
        %928 = vmatprep.subr.mxu0 0.0
        %929 = vmatpush2.msra.mxu0 0.0
        %930 = vmatprep.subr.mxu0 0.0
        %931 = vmatpush2.msra.mxu0 0.0
        %932 = vmatprep.subr.mxu0 0.0
        %933 = vmatpush2.msra.mxu0 0.0
        %934 = vmatprep.subr.mxu0 0.0
        %935 = vmatpush2.msra.mxu0 0.0
        %936 = vmatprep.subr.mxu0 0.0
        %937 = vmatpush2.msra.mxu0 0.0
        %938 = vmatprep.subr.mxu0 0.0
        %939 = vmatpush2.msra.mxu0 0.0
        %940 = vmatprep.subr.mxu0 0.0
        %941 = vmatpush2.msra.mxu0 0.0
        %942 = vmatprep.subr.mxu0 0.0
        %943 = vmatpush2.msra.mxu0 0.0
        %944 = vmatprep.subr.mxu0 0.0
        %945 = vmatpush2.msra.mxu0 0.0
        %946 = vmatprep.subr.mxu0 0.0
        %947 = vmatpush2.msra.mxu0 0.0
        %948 = vmatprep.mubr.f32.mxu0 0.0
        %v949 = vand.u32 %v199, 4294901760
        %950 = vmatmul.mubr.f32.gmra.mxu0 %v949
        %v951 = vpop.f32.mrf.mxu0
        %v952 = vadd.f32 %v847, %v951
        %v953 = vpop.f32.mrf.mxu0
        %954 = vmatprep.mubr.f32.mxu0 0.0
        %v955 = vand.u32 %v200, 4294901760
        %956 = vmatmul.mubr.f32.gmra.mxu0 %v955
        %v957 = vpop.f32.mrf.mxu0
        %v958 = vadd.f32 %v853, %v957
        %v959 = vpop.f32.mrf.mxu0
        %960 = vmatprep.mubr.f32.mxu0 0.0
        %v961 = vand.u32 %v201, 4294901760
        %962 = vmatmul.mubr.f32.gmra.mxu0 %v961
        %v963 = vpop.f32.mrf.mxu0
        %v964 = vadd.f32 %v859, %v963
        %v965 = vpop.f32.mrf.mxu0
        %966 = vmatprep.mubr.f32.mxu0 0.0
        %v967 = vand.u32 %v202, 4294901760
        %968 = vmatmul.mubr.f32.gmra.mxu0 %v967
        %v969 = vpop.f32.mrf.mxu0
        %v970 = vadd.f32 %v865, %v969
        %v971 = vpop.f32.mrf.mxu0
        %972 = vdwg.mxu0
        %v973 = vmul.f32 %v952, 0.0625
        %v974 = vmul.f32 %v958, 0.0625
        %v975 = vmul.f32 %v964, 0.0625
        %v976 = vmul.f32 %v970, 0.0625
        %v977 = vsub.f32 %v199, %v973
        %v978 = vsub.f32 %v200, %v974
        %v979 = vsub.f32 %v201, %v975
        %v980 = vsub.f32 %v202, %v976
        %v981 = vmul.f32 %v977, %v977
        %v982 = vmul.f32 %v978, %v978
        %v983 = vmul.f32 %v979, %v979
        %v984 = vmul.f32 %v980, %v980
        %985 = vmatprep.subr.mxu0 0.0
        %v986 = vand.u32 %v198, 4294901760
        %987 = vmatpush1.msra.mxu0 %v986
        %988 = vmatprep.subr.mxu0 0.0
        %v989 = vand.u32 %v197, 4294901760
        %990 = vmatpush1.msra.mxu0 %v989
        %991 = vmatprep.subr.mxu0 0.0
        %v992 = vand.u32 %v196, 4294901760
        %993 = vmatpush1.msra.mxu0 %v992
        %994 = vmatprep.subr.mxu0 0.0
        %v995 = vand.u32 %v195, 4294901760
        %996 = vmatpush1.msra.mxu0 %v995
        %997 = vmatprep.subr.mxu0 0.0
        %v998 = vand.u32 %v194, 4294901760
        %999 = vmatpush1.msra.mxu0 %v998
        %1000 = vmatprep.subr.mxu0 0.0
        %v1001 = vand.u32 %v193, 4294901760
        %1002 = vmatpush1.msra.mxu0 %v1001
        %1003 = vmatprep.subr.mxu0 0.0
        %v1004 = vand.u32 %v192, 4294901760
        %1005 = vmatpush1.msra.mxu0 %v1004
        %1006 = vmatprep.subr.mxu0 0.0
        %v1007 = vand.u32 %v191, 4294901760
        %1008 = vmatpush1.msra.mxu0 %v1007
        %1009 = vmatprep.subr.mxu0 0.0
        %v1010 = vand.u32 %v190, 4294901760
        %1011 = vmatpush1.msra.mxu0 %v1010
        %1012 = vmatprep.subr.mxu0 0.0
        %v1013 = vand.u32 %v189, 4294901760
        %1014 = vmatpush1.msra.mxu0 %v1013
        %1015 = vmatprep.subr.mxu0 0.0
        %v1016 = vand.u32 %v188, 4294901760
        %1017 = vmatpush1.msra.mxu0 %v1016
        %1018 = vmatprep.subr.mxu0 0.0
        %v1019 = vand.u32 %v187, 4294901760
        %1020 = vmatpush1.msra.mxu0 %v1019
        %1021 = vmatprep.subr.mxu0 0.0
        %v1022 = vand.u32 %v186, 4294901760
        %1023 = vmatpush1.msra.mxu0 %v1022
        %1024 = vmatprep.subr.mxu0 0.0
        %v1025 = vand.u32 %v185, 4294901760
        %1026 = vmatpush1.msra.mxu0 %v1025
        %1027 = vmatprep.subr.mxu0 0.0
        %v1028 = vand.u32 %v184, 4294901760
        %1029 = vmatpush1.msra.mxu0 %v1028
        %1030 = vmatprep.subr.mxu0 0.0
        %v1031 = vand.u32 %v183, 4294901760
        %1032 = vmatpush1.msra.mxu0 %v1031
        %1033 = vmatprep.subr.mxu0 0.0
        %1034 = vmatpush2.msra.mxu0 0.0
        %1035 = vmatprep.subr.mxu0 0.0
        %1036 = vmatpush2.msra.mxu0 0.0
        %1037 = vmatprep.subr.mxu0 0.0
        %1038 = vmatpush2.msra.mxu0 0.0
        %1039 = vmatprep.subr.mxu0 0.0
        %1040 = vmatpush2.msra.mxu0 0.0
        %1041 = vmatprep.subr.mxu0 0.0
        %1042 = vmatpush2.msra.mxu0 0.0
        %1043 = vmatprep.subr.mxu0 0.0
        %1044 = vmatpush2.msra.mxu0 0.0
        %1045 = vmatprep.subr.mxu0 0.0
        %1046 = vmatpush2.msra.mxu0 0.0
        %1047 = vmatprep.subr.mxu0 0.0
        %1048 = vmatpush2.msra.mxu0 0.0
        %1049 = vmatprep.subr.mxu0 0.0
        %1050 = vmatpush2.msra.mxu0 0.0
        %1051 = vmatprep.subr.mxu0 0.0
        %1052 = vmatpush2.msra.mxu0 0.0
        %1053 = vmatprep.subr.mxu0 0.0
        %1054 = vmatpush2.msra.mxu0 0.0
        %1055 = vmatprep.subr.mxu0 0.0
        %1056 = vmatpush2.msra.mxu0 0.0
        %1057 = vmatprep.subr.mxu0 0.0
        %1058 = vmatpush2.msra.mxu0 0.0
        %1059 = vmatprep.subr.mxu0 0.0
        %1060 = vmatpush2.msra.mxu0 0.0
        %1061 = vmatprep.subr.mxu0 0.0
        %1062 = vmatpush2.msra.mxu0 0.0
        %1063 = vmatprep.subr.mxu0 0.0
        %1064 = vmatpush2.msra.mxu0 0.0
        %1065 = vmatprep.mubr.f32.mxu0 0.0
        %v1066 = vand.u32 %v981, 4294901760
        %v1067 = vsub.f32 %v981, %v1066
        %v1068 = vand.u32 %v1067, 4294901760
        %v1069 = vsub.f32 %v1067, %v1068
        %v1070 = vand.u32 %v1069, 4294901760
        %1071 = vmatmul.mubr.f32.gmra.mxu0 %v1070
        %v1072 = vpop.f32.mrf.mxu0
        %v1073 = vadd.f32 0.0, %v1072
        %v1074 = vpop.f32.mrf.mxu0
        %1075 = vmatprep.mubr.f32.mxu0 0.0
        %v1076 = vand.u32 %v982, 4294901760
        %v1077 = vsub.f32 %v982, %v1076
        %v1078 = vand.u32 %v1077, 4294901760
        %v1079 = vsub.f32 %v1077, %v1078
        %v1080 = vand.u32 %v1079, 4294901760
        %1081 = vmatmul.mubr.f32.gmra.mxu0 %v1080
        %v1082 = vpop.f32.mrf.mxu0
        %v1083 = vadd.f32 0.0, %v1082
        %v1084 = vpop.f32.mrf.mxu0
        %1085 = vmatprep.mubr.f32.mxu0 0.0
        %v1086 = vand.u32 %v983, 4294901760
        %v1087 = vsub.f32 %v983, %v1086
        %v1088 = vand.u32 %v1087, 4294901760
        %v1089 = vsub.f32 %v1087, %v1088
        %v1090 = vand.u32 %v1089, 4294901760
        %1091 = vmatmul.mubr.f32.gmra.mxu0 %v1090
        %v1092 = vpop.f32.mrf.mxu0
        %v1093 = vadd.f32 0.0, %v1092
        %v1094 = vpop.f32.mrf.mxu0
        %1095 = vmatprep.mubr.f32.mxu0 0.0
        %v1096 = vand.u32 %v984, 4294901760
        %v1097 = vsub.f32 %v984, %v1096
        %v1098 = vand.u32 %v1097, 4294901760
        %v1099 = vsub.f32 %v1097, %v1098
        %v1100 = vand.u32 %v1099, 4294901760
        %1101 = vmatmul.mubr.f32.gmra.mxu0 %v1100
        %v1102 = vpop.f32.mrf.mxu0
        %v1103 = vadd.f32 0.0, %v1102
        %v1104 = vpop.f32.mrf.mxu0
        %1105 = vdwg.mxu0
        %1106 = vmatprep.subr.mxu0 0.0
        %v1107 = vand.u32 %v198, 4294901760
        %v1108 = vsub.f32 %v198, %v1107
        %v1109 = vand.u32 %v1108, 4294901760
        %v1110 = vsub.f32 %v1108, %v1109
        %v1111 = vand.u32 %v1110, 4294901760
        %1112 = vmatpush1.msra.mxu0 %v1111
        %1113 = vmatprep.subr.mxu0 0.0
        %v1114 = vand.u32 %v197, 4294901760
        %v1115 = vsub.f32 %v197, %v1114
        %v1116 = vand.u32 %v1115, 4294901760
        %v1117 = vsub.f32 %v1115, %v1116
        %v1118 = vand.u32 %v1117, 4294901760
        %1119 = vmatpush1.msra.mxu0 %v1118
        %1120 = vmatprep.subr.mxu0 0.0
        %v1121 = vand.u32 %v196, 4294901760
        %v1122 = vsub.f32 %v196, %v1121
        %v1123 = vand.u32 %v1122, 4294901760
        %v1124 = vsub.f32 %v1122, %v1123
        %v1125 = vand.u32 %v1124, 4294901760
        %1126 = vmatpush1.msra.mxu0 %v1125
        %1127 = vmatprep.subr.mxu0 0.0
        %v1128 = vand.u32 %v195, 4294901760
        %v1129 = vsub.f32 %v195, %v1128
        %v1130 = vand.u32 %v1129, 4294901760
        %v1131 = vsub.f32 %v1129, %v1130
        %v1132 = vand.u32 %v1131, 4294901760
        %1133 = vmatpush1.msra.mxu0 %v1132
        %1134 = vmatprep.subr.mxu0 0.0
        %v1135 = vand.u32 %v194, 4294901760
        %v1136 = vsub.f32 %v194, %v1135
        %v1137 = vand.u32 %v1136, 4294901760
        %v1138 = vsub.f32 %v1136, %v1137
        %v1139 = vand.u32 %v1138, 4294901760
        %1140 = vmatpush1.msra.mxu0 %v1139
        %1141 = vmatprep.subr.mxu0 0.0
        %v1142 = vand.u32 %v193, 4294901760
        %v1143 = vsub.f32 %v193, %v1142
        %v1144 = vand.u32 %v1143, 4294901760
        %v1145 = vsub.f32 %v1143, %v1144
        %v1146 = vand.u32 %v1145, 4294901760
        %1147 = vmatpush1.msra.mxu0 %v1146
        %1148 = vmatprep.subr.mxu0 0.0
        %v1149 = vand.u32 %v192, 4294901760
        %v1150 = vsub.f32 %v192, %v1149
        %v1151 = vand.u32 %v1150, 4294901760
        %v1152 = vsub.f32 %v1150, %v1151
        %v1153 = vand.u32 %v1152, 4294901760
        %1154 = vmatpush1.msra.mxu0 %v1153
        %1155 = vmatprep.subr.mxu0 0.0
        %v1156 = vand.u32 %v191, 4294901760
        %v1157 = vsub.f32 %v191, %v1156
        %v1158 = vand.u32 %v1157, 4294901760
        %v1159 = vsub.f32 %v1157, %v1158
        %v1160 = vand.u32 %v1159, 4294901760
        %1161 = vmatpush1.msra.mxu0 %v1160
        %1162 = vmatprep.subr.mxu0 0.0
        %v1163 = vand.u32 %v190, 4294901760
        %v1164 = vsub.f32 %v190, %v1163
        %v1165 = vand.u32 %v1164, 4294901760
        %v1166 = vsub.f32 %v1164, %v1165
        %v1167 = vand.u32 %v1166, 4294901760
        %1168 = vmatpush1.msra.mxu0 %v1167
        %1169 = vmatprep.subr.mxu0 0.0
        %v1170 = vand.u32 %v189, 4294901760
        %v1171 = vsub.f32 %v189, %v1170
        %v1172 = vand.u32 %v1171, 4294901760
        %v1173 = vsub.f32 %v1171, %v1172
        %v1174 = vand.u32 %v1173, 4294901760
        %1175 = vmatpush1.msra.mxu0 %v1174
        %1176 = vmatprep.subr.mxu0 0.0
        %v1177 = vand.u32 %v188, 4294901760
        %v1178 = vsub.f32 %v188, %v1177
        %v1179 = vand.u32 %v1178, 4294901760
        %v1180 = vsub.f32 %v1178, %v1179
        %v1181 = vand.u32 %v1180, 4294901760
        %1182 = vmatpush1.msra.mxu0 %v1181
        %1183 = vmatprep.subr.mxu0 0.0
        %v1184 = vand.u32 %v187, 4294901760
        %v1185 = vsub.f32 %v187, %v1184
        %v1186 = vand.u32 %v1185, 4294901760
        %v1187 = vsub.f32 %v1185, %v1186
        %v1188 = vand.u32 %v1187, 4294901760
        %1189 = vmatpush1.msra.mxu0 %v1188
        %1190 = vmatprep.subr.mxu0 0.0
        %v1191 = vand.u32 %v186, 4294901760
        %v1192 = vsub.f32 %v186, %v1191
        %v1193 = vand.u32 %v1192, 4294901760
        %v1194 = vsub.f32 %v1192, %v1193
        %v1195 = vand.u32 %v1194, 4294901760
        %1196 = vmatpush1.msra.mxu0 %v1195
        %1197 = vmatprep.subr.mxu0 0.0
        %v1198 = vand.u32 %v185, 4294901760
        %v1199 = vsub.f32 %v185, %v1198
        %v1200 = vand.u32 %v1199, 4294901760
        %v1201 = vsub.f32 %v1199, %v1200
        %v1202 = vand.u32 %v1201, 4294901760
        %1203 = vmatpush1.msra.mxu0 %v1202
        %1204 = vmatprep.subr.mxu0 0.0
        %v1205 = vand.u32 %v184, 4294901760
        %v1206 = vsub.f32 %v184, %v1205
        %v1207 = vand.u32 %v1206, 4294901760
        %v1208 = vsub.f32 %v1206, %v1207
        %v1209 = vand.u32 %v1208, 4294901760
        %1210 = vmatpush1.msra.mxu0 %v1209
        %1211 = vmatprep.subr.mxu0 0.0
        %v1212 = vand.u32 %v183, 4294901760
        %v1213 = vsub.f32 %v183, %v1212
        %v1214 = vand.u32 %v1213, 4294901760
        %v1215 = vsub.f32 %v1213, %v1214
        %v1216 = vand.u32 %v1215, 4294901760
        %1217 = vmatpush1.msra.mxu0 %v1216
        %1218 = vmatprep.subr.mxu0 0.0
        %1219 = vmatpush2.msra.mxu0 0.0
        %1220 = vmatprep.subr.mxu0 0.0
        %1221 = vmatpush2.msra.mxu0 0.0
        %1222 = vmatprep.subr.mxu0 0.0
        %1223 = vmatpush2.msra.mxu0 0.0
        %1224 = vmatprep.subr.mxu0 0.0
        %1225 = vmatpush2.msra.mxu0 0.0
        %1226 = vmatprep.subr.mxu0 0.0
        %1227 = vmatpush2.msra.mxu0 0.0
        %1228 = vmatprep.subr.mxu0 0.0
        %1229 = vmatpush2.msra.mxu0 0.0
        %1230 = vmatprep.subr.mxu0 0.0
        %1231 = vmatpush2.msra.mxu0 0.0
        %1232 = vmatprep.subr.mxu0 0.0
        %1233 = vmatpush2.msra.mxu0 0.0
        %1234 = vmatprep.subr.mxu0 0.0
        %1235 = vmatpush2.msra.mxu0 0.0
        %1236 = vmatprep.subr.mxu0 0.0
        %1237 = vmatpush2.msra.mxu0 0.0
        %1238 = vmatprep.subr.mxu0 0.0
        %1239 = vmatpush2.msra.mxu0 0.0
        %1240 = vmatprep.subr.mxu0 0.0
        %1241 = vmatpush2.msra.mxu0 0.0
        %1242 = vmatprep.subr.mxu0 0.0
        %1243 = vmatpush2.msra.mxu0 0.0
        %1244 = vmatprep.subr.mxu0 0.0
        %1245 = vmatpush2.msra.mxu0 0.0
        %1246 = vmatprep.subr.mxu0 0.0
        %1247 = vmatpush2.msra.mxu0 0.0
        %1248 = vmatprep.subr.mxu0 0.0
        %1249 = vmatpush2.msra.mxu0 0.0
        %1250 = vmatprep.mubr.f32.mxu0 0.0
        %v1251 = vand.u32 %v981, 4294901760
        %1252 = vmatmul.mubr.f32.gmra.mxu0 %v1251
        %v1253 = vpop.f32.mrf.mxu0
        %v1254 = vadd.f32 %v1073, %v1253
        %v1255 = vpop.f32.mrf.mxu0
        %1256 = vmatprep.mubr.f32.mxu0 0.0
        %v1257 = vand.u32 %v982, 4294901760
        %1258 = vmatmul.mubr.f32.gmra.mxu0 %v1257
        %v1259 = vpop.f32.mrf.mxu0
        %v1260 = vadd.f32 %v1083, %v1259
        %v1261 = vpop.f32.mrf.mxu0
        %1262 = vmatprep.mubr.f32.mxu0 0.0
        %v1263 = vand.u32 %v983, 4294901760
        %1264 = vmatmul.mubr.f32.gmra.mxu0 %v1263
        %v1265 = vpop.f32.mrf.mxu0
        %v1266 = vadd.f32 %v1093, %v1265
        %v1267 = vpop.f32.mrf.mxu0
        %1268 = vmatprep.mubr.f32.mxu0 0.0
        %v1269 = vand.u32 %v984, 4294901760
        %1270 = vmatmul.mubr.f32.gmra.mxu0 %v1269
        %v1271 = vpop.f32.mrf.mxu0
        %v1272 = vadd.f32 %v1103, %v1271
        %v1273 = vpop.f32.mrf.mxu0
        %1274 = vdwg.mxu0
        %1275 = vmatprep.subr.mxu0 0.0
        %v1276 = vand.u32 %v198, 4294901760
        %v1277 = vsub.f32 %v198, %v1276
        %1278 = vmatpush1.msra.mxu0 %v1277
        %1279 = vmatprep.subr.mxu0 0.0
        %v1280 = vand.u32 %v197, 4294901760
        %v1281 = vsub.f32 %v197, %v1280
        %1282 = vmatpush1.msra.mxu0 %v1281
        %1283 = vmatprep.subr.mxu0 0.0
        %v1284 = vand.u32 %v196, 4294901760
        %v1285 = vsub.f32 %v196, %v1284
        %1286 = vmatpush1.msra.mxu0 %v1285
        %1287 = vmatprep.subr.mxu0 0.0
        %v1288 = vand.u32 %v195, 4294901760
        %v1289 = vsub.f32 %v195, %v1288
        %1290 = vmatpush1.msra.mxu0 %v1289
        %1291 = vmatprep.subr.mxu0 0.0
        %v1292 = vand.u32 %v194, 4294901760
        %v1293 = vsub.f32 %v194, %v1292
        %1294 = vmatpush1.msra.mxu0 %v1293
        %1295 = vmatprep.subr.mxu0 0.0
        %v1296 = vand.u32 %v193, 4294901760
        %v1297 = vsub.f32 %v193, %v1296
        %1298 = vmatpush1.msra.mxu0 %v1297
        %1299 = vmatprep.subr.mxu0 0.0
        %v1300 = vand.u32 %v192, 4294901760
        %v1301 = vsub.f32 %v192, %v1300
        %1302 = vmatpush1.msra.mxu0 %v1301
        %1303 = vmatprep.subr.mxu0 0.0
        %v1304 = vand.u32 %v191, 4294901760
        %v1305 = vsub.f32 %v191, %v1304
        %1306 = vmatpush1.msra.mxu0 %v1305
        %1307 = vmatprep.subr.mxu0 0.0
        %v1308 = vand.u32 %v190, 4294901760
        %v1309 = vsub.f32 %v190, %v1308
        %1310 = vmatpush1.msra.mxu0 %v1309
        %1311 = vmatprep.subr.mxu0 0.0
        %v1312 = vand.u32 %v189, 4294901760
        %v1313 = vsub.f32 %v189, %v1312
        %1314 = vmatpush1.msra.mxu0 %v1313
        %1315 = vmatprep.subr.mxu0 0.0
        %v1316 = vand.u32 %v188, 4294901760
        %v1317 = vsub.f32 %v188, %v1316
        %1318 = vmatpush1.msra.mxu0 %v1317
        %1319 = vmatprep.subr.mxu0 0.0
        %v1320 = vand.u32 %v187, 4294901760
        %v1321 = vsub.f32 %v187, %v1320
        %1322 = vmatpush1.msra.mxu0 %v1321
        %1323 = vmatprep.subr.mxu0 0.0
        %v1324 = vand.u32 %v186, 4294901760
        %v1325 = vsub.f32 %v186, %v1324
        %1326 = vmatpush1.msra.mxu0 %v1325
        %1327 = vmatprep.subr.mxu0 0.0
        %v1328 = vand.u32 %v185, 4294901760
        %v1329 = vsub.f32 %v185, %v1328
        %1330 = vmatpush1.msra.mxu0 %v1329
        %1331 = vmatprep.subr.mxu0 0.0
        %v1332 = vand.u32 %v184, 4294901760
        %v1333 = vsub.f32 %v184, %v1332
        %1334 = vmatpush1.msra.mxu0 %v1333
        %1335 = vmatprep.subr.mxu0 0.0
        %v1336 = vand.u32 %v183, 4294901760
        %v1337 = vsub.f32 %v183, %v1336
        %1338 = vmatpush1.msra.mxu0 %v1337
        %1339 = vmatprep.subr.mxu0 0.0
        %1340 = vmatpush2.msra.mxu0 0.0
        %1341 = vmatprep.subr.mxu0 0.0
        %1342 = vmatpush2.msra.mxu0 0.0
        %1343 = vmatprep.subr.mxu0 0.0
        %1344 = vmatpush2.msra.mxu0 0.0
        %1345 = vmatprep.subr.mxu0 0.0
        %1346 = vmatpush2.msra.mxu0 0.0
        %1347 = vmatprep.subr.mxu0 0.0
        %1348 = vmatpush2.msra.mxu0 0.0
        %1349 = vmatprep.subr.mxu0 0.0
        %1350 = vmatpush2.msra.mxu0 0.0
        %1351 = vmatprep.subr.mxu0 0.0
        %1352 = vmatpush2.msra.mxu0 0.0
        %1353 = vmatprep.subr.mxu0 0.0
        %1354 = vmatpush2.msra.mxu0 0.0
        %1355 = vmatprep.subr.mxu0 0.0
        %1356 = vmatpush2.msra.mxu0 0.0
        %1357 = vmatprep.subr.mxu0 0.0
        %1358 = vmatpush2.msra.mxu0 0.0
        %1359 = vmatprep.subr.mxu0 0.0
        %1360 = vmatpush2.msra.mxu0 0.0
        %1361 = vmatprep.subr.mxu0 0.0
        %1362 = vmatpush2.msra.mxu0 0.0
        %1363 = vmatprep.subr.mxu0 0.0
        %1364 = vmatpush2.msra.mxu0 0.0
        %1365 = vmatprep.subr.mxu0 0.0
        %1366 = vmatpush2.msra.mxu0 0.0
        %1367 = vmatprep.subr.mxu0 0.0
        %1368 = vmatpush2.msra.mxu0 0.0
        %1369 = vmatprep.subr.mxu0 0.0
        %1370 = vmatpush2.msra.mxu0 0.0
        %1371 = vmatprep.mubr.f32.mxu0 0.0
        %v1372 = vand.u32 %v981, 4294901760
        %v1373 = vsub.f32 %v981, %v1372
        %1374 = vmatmul.mubr.f32.gmra.mxu0 %v1373
        %v1375 = vpop.f32.mrf.mxu0
        %v1376 = vadd.f32 %v1254, %v1375
        %v1377 = vpop.f32.mrf.mxu0
        %1378 = vmatprep.mubr.f32.mxu0 0.0
        %v1379 = vand.u32 %v982, 4294901760
        %v1380 = vsub.f32 %v982, %v1379
        %1381 = vmatmul.mubr.f32.gmra.mxu0 %v1380
        %v1382 = vpop.f32.mrf.mxu0
        %v1383 = vadd.f32 %v1260, %v1382
        %v1384 = vpop.f32.mrf.mxu0
        %1385 = vmatprep.mubr.f32.mxu0 0.0
        %v1386 = vand.u32 %v983, 4294901760
        %v1387 = vsub.f32 %v983, %v1386
        %1388 = vmatmul.mubr.f32.gmra.mxu0 %v1387
        %v1389 = vpop.f32.mrf.mxu0
        %v1390 = vadd.f32 %v1266, %v1389
        %v1391 = vpop.f32.mrf.mxu0
        %1392 = vmatprep.mubr.f32.mxu0 0.0
        %v1393 = vand.u32 %v984, 4294901760
        %v1394 = vsub.f32 %v984, %v1393
        %1395 = vmatmul.mubr.f32.gmra.mxu0 %v1394
        %v1396 = vpop.f32.mrf.mxu0
        %v1397 = vadd.f32 %v1272, %v1396
        %v1398 = vpop.f32.mrf.mxu0
        %1399 = vdwg.mxu0
        %1400 = vmatprep.subr.mxu0 0.0
        %v1401 = vand.u32 %v198, 4294901760
        %1402 = vmatpush1.msra.mxu0 %v1401
        %1403 = vmatprep.subr.mxu0 0.0
        %v1404 = vand.u32 %v197, 4294901760
        %1405 = vmatpush1.msra.mxu0 %v1404
        %1406 = vmatprep.subr.mxu0 0.0
        %v1407 = vand.u32 %v196, 4294901760
        %1408 = vmatpush1.msra.mxu0 %v1407
        %1409 = vmatprep.subr.mxu0 0.0
        %v1410 = vand.u32 %v195, 4294901760
        %1411 = vmatpush1.msra.mxu0 %v1410
        %1412 = vmatprep.subr.mxu0 0.0
        %v1413 = vand.u32 %v194, 4294901760
        %1414 = vmatpush1.msra.mxu0 %v1413
        %1415 = vmatprep.subr.mxu0 0.0
        %v1416 = vand.u32 %v193, 4294901760
        %1417 = vmatpush1.msra.mxu0 %v1416
        %1418 = vmatprep.subr.mxu0 0.0
        %v1419 = vand.u32 %v192, 4294901760
        %1420 = vmatpush1.msra.mxu0 %v1419
        %1421 = vmatprep.subr.mxu0 0.0
        %v1422 = vand.u32 %v191, 4294901760
        %1423 = vmatpush1.msra.mxu0 %v1422
        %1424 = vmatprep.subr.mxu0 0.0
        %v1425 = vand.u32 %v190, 4294901760
        %1426 = vmatpush1.msra.mxu0 %v1425
        %1427 = vmatprep.subr.mxu0 0.0
        %v1428 = vand.u32 %v189, 4294901760
        %1429 = vmatpush1.msra.mxu0 %v1428
        %1430 = vmatprep.subr.mxu0 0.0
        %v1431 = vand.u32 %v188, 4294901760
        %1432 = vmatpush1.msra.mxu0 %v1431
        %1433 = vmatprep.subr.mxu0 0.0
        %v1434 = vand.u32 %v187, 4294901760
        %1435 = vmatpush1.msra.mxu0 %v1434
        %1436 = vmatprep.subr.mxu0 0.0
        %v1437 = vand.u32 %v186, 4294901760
        %1438 = vmatpush1.msra.mxu0 %v1437
        %1439 = vmatprep.subr.mxu0 0.0
        %v1440 = vand.u32 %v185, 4294901760
        %1441 = vmatpush1.msra.mxu0 %v1440
        %1442 = vmatprep.subr.mxu0 0.0
        %v1443 = vand.u32 %v184, 4294901760
        %1444 = vmatpush1.msra.mxu0 %v1443
        %1445 = vmatprep.subr.mxu0 0.0
        %v1446 = vand.u32 %v183, 4294901760
        %1447 = vmatpush1.msra.mxu0 %v1446
        %1448 = vmatprep.subr.mxu0 0.0
        %1449 = vmatpush2.msra.mxu0 0.0
        %1450 = vmatprep.subr.mxu0 0.0
        %1451 = vmatpush2.msra.mxu0 0.0
        %1452 = vmatprep.subr.mxu0 0.0
        %1453 = vmatpush2.msra.mxu0 0.0
        %1454 = vmatprep.subr.mxu0 0.0
        %1455 = vmatpush2.msra.mxu0 0.0
        %1456 = vmatprep.subr.mxu0 0.0
        %1457 = vmatpush2.msra.mxu0 0.0
        %1458 = vmatprep.subr.mxu0 0.0
        %1459 = vmatpush2.msra.mxu0 0.0
        %1460 = vmatprep.subr.mxu0 0.0
        %1461 = vmatpush2.msra.mxu0 0.0
        %1462 = vmatprep.subr.mxu0 0.0
        %1463 = vmatpush2.msra.mxu0 0.0
        %1464 = vmatprep.subr.mxu0 0.0
        %1465 = vmatpush2.msra.mxu0 0.0
        %1466 = vmatprep.subr.mxu0 0.0
        %1467 = vmatpush2.msra.mxu0 0.0
        %1468 = vmatprep.subr.mxu0 0.0
        %1469 = vmatpush2.msra.mxu0 0.0
        %1470 = vmatprep.subr.mxu0 0.0
        %1471 = vmatpush2.msra.mxu0 0.0
        %1472 = vmatprep.subr.mxu0 0.0
        %1473 = vmatpush2.msra.mxu0 0.0
        %1474 = vmatprep.subr.mxu0 0.0
        %1475 = vmatpush2.msra.mxu0 0.0
        %1476 = vmatprep.subr.mxu0 0.0
        %1477 = vmatpush2.msra.mxu0 0.0
        %1478 = vmatprep.subr.mxu0 0.0
        %1479 = vmatpush2.msra.mxu0 0.0
        %1480 = vmatprep.mubr.f32.mxu0 0.0
        %v1481 = vand.u32 %v981, 4294901760
        %v1482 = vsub.f32 %v981, %v1481
        %v1483 = vand.u32 %v1482, 4294901760
        %1484 = vmatmul.mubr.f32.gmra.mxu0 %v1483
        %v1485 = vpop.f32.mrf.mxu0
        %v1486 = vadd.f32 %v1376, %v1485
        %v1487 = vpop.f32.mrf.mxu0
        %1488 = vmatprep.mubr.f32.mxu0 0.0
        %v1489 = vand.u32 %v982, 4294901760
        %v1490 = vsub.f32 %v982, %v1489
        %v1491 = vand.u32 %v1490, 4294901760
        %1492 = vmatmul.mubr.f32.gmra.mxu0 %v1491
        %v1493 = vpop.f32.mrf.mxu0
        %v1494 = vadd.f32 %v1383, %v1493
        %v1495 = vpop.f32.mrf.mxu0
        %1496 = vmatprep.mubr.f32.mxu0 0.0
        %v1497 = vand.u32 %v983, 4294901760
        %v1498 = vsub.f32 %v983, %v1497
        %v1499 = vand.u32 %v1498, 4294901760
        %1500 = vmatmul.mubr.f32.gmra.mxu0 %v1499
        %v1501 = vpop.f32.mrf.mxu0
        %v1502 = vadd.f32 %v1390, %v1501
        %v1503 = vpop.f32.mrf.mxu0
        %1504 = vmatprep.mubr.f32.mxu0 0.0
        %v1505 = vand.u32 %v984, 4294901760
        %v1506 = vsub.f32 %v984, %v1505
        %v1507 = vand.u32 %v1506, 4294901760
        %1508 = vmatmul.mubr.f32.gmra.mxu0 %v1507
        %v1509 = vpop.f32.mrf.mxu0
        %v1510 = vadd.f32 %v1397, %v1509
        %v1511 = vpop.f32.mrf.mxu0
        %1512 = vdwg.mxu0
        %1513 = vmatprep.subr.mxu0 0.0
        %v1514 = vand.u32 %v198, 4294901760
        %v1515 = vsub.f32 %v198, %v1514
        %v1516 = vand.u32 %v1515, 4294901760
        %1517 = vmatpush1.msra.mxu0 %v1516
        %1518 = vmatprep.subr.mxu0 0.0
        %v1519 = vand.u32 %v197, 4294901760
        %v1520 = vsub.f32 %v197, %v1519
        %v1521 = vand.u32 %v1520, 4294901760
        %1522 = vmatpush1.msra.mxu0 %v1521
        %1523 = vmatprep.subr.mxu0 0.0
        %v1524 = vand.u32 %v196, 4294901760
        %v1525 = vsub.f32 %v196, %v1524
        %v1526 = vand.u32 %v1525, 4294901760
        %1527 = vmatpush1.msra.mxu0 %v1526
        %1528 = vmatprep.subr.mxu0 0.0
        %v1529 = vand.u32 %v195, 4294901760
        %v1530 = vsub.f32 %v195, %v1529
        %v1531 = vand.u32 %v1530, 4294901760
        %1532 = vmatpush1.msra.mxu0 %v1531
        %1533 = vmatprep.subr.mxu0 0.0
        %v1534 = vand.u32 %v194, 4294901760
        %v1535 = vsub.f32 %v194, %v1534
        %v1536 = vand.u32 %v1535, 4294901760
        %1537 = vmatpush1.msra.mxu0 %v1536
        %1538 = vmatprep.subr.mxu0 0.0
        %v1539 = vand.u32 %v193, 4294901760
        %v1540 = vsub.f32 %v193, %v1539
        %v1541 = vand.u32 %v1540, 4294901760
        %1542 = vmatpush1.msra.mxu0 %v1541
        %1543 = vmatprep.subr.mxu0 0.0
        %v1544 = vand.u32 %v192, 4294901760
        %v1545 = vsub.f32 %v192, %v1544
        %v1546 = vand.u32 %v1545, 4294901760
        %1547 = vmatpush1.msra.mxu0 %v1546
        %1548 = vmatprep.subr.mxu0 0.0
        %v1549 = vand.u32 %v191, 4294901760
        %v1550 = vsub.f32 %v191, %v1549
        %v1551 = vand.u32 %v1550, 4294901760
        %1552 = vmatpush1.msra.mxu0 %v1551
        %1553 = vmatprep.subr.mxu0 0.0
        %v1554 = vand.u32 %v190, 4294901760
        %v1555 = vsub.f32 %v190, %v1554
        %v1556 = vand.u32 %v1555, 4294901760
        %1557 = vmatpush1.msra.mxu0 %v1556
        %1558 = vmatprep.subr.mxu0 0.0
        %v1559 = vand.u32 %v189, 4294901760
        %v1560 = vsub.f32 %v189, %v1559
        %v1561 = vand.u32 %v1560, 4294901760
        %1562 = vmatpush1.msra.mxu0 %v1561
        %1563 = vmatprep.subr.mxu0 0.0
        %v1564 = vand.u32 %v188, 4294901760
        %v1565 = vsub.f32 %v188, %v1564
        %v1566 = vand.u32 %v1565, 4294901760
        %1567 = vmatpush1.msra.mxu0 %v1566
        %1568 = vmatprep.subr.mxu0 0.0
        %v1569 = vand.u32 %v187, 4294901760
        %v1570 = vsub.f32 %v187, %v1569
        %v1571 = vand.u32 %v1570, 4294901760
        %1572 = vmatpush1.msra.mxu0 %v1571
        %1573 = vmatprep.subr.mxu0 0.0
        %v1574 = vand.u32 %v186, 4294901760
        %v1575 = vsub.f32 %v186, %v1574
        %v1576 = vand.u32 %v1575, 4294901760
        %1577 = vmatpush1.msra.mxu0 %v1576
        %1578 = vmatprep.subr.mxu0 0.0
        %v1579 = vand.u32 %v185, 4294901760
        %v1580 = vsub.f32 %v185, %v1579
        %v1581 = vand.u32 %v1580, 4294901760
        %1582 = vmatpush1.msra.mxu0 %v1581
        %1583 = vmatprep.subr.mxu0 0.0
        %v1584 = vand.u32 %v184, 4294901760
        %v1585 = vsub.f32 %v184, %v1584
        %v1586 = vand.u32 %v1585, 4294901760
        %1587 = vmatpush1.msra.mxu0 %v1586
        %1588 = vmatprep.subr.mxu0 0.0
        %v1589 = vand.u32 %v183, 4294901760
        %v1590 = vsub.f32 %v183, %v1589
        %v1591 = vand.u32 %v1590, 4294901760
        %1592 = vmatpush1.msra.mxu0 %v1591
        %1593 = vmatprep.subr.mxu0 0.0
        %1594 = vmatpush2.msra.mxu0 0.0
        %1595 = vmatprep.subr.mxu0 0.0
        %1596 = vmatpush2.msra.mxu0 0.0
        %1597 = vmatprep.subr.mxu0 0.0
        %1598 = vmatpush2.msra.mxu0 0.0
        %1599 = vmatprep.subr.mxu0 0.0
        %1600 = vmatpush2.msra.mxu0 0.0
        %1601 = vmatprep.subr.mxu0 0.0
        %1602 = vmatpush2.msra.mxu0 0.0
        %1603 = vmatprep.subr.mxu0 0.0
        %1604 = vmatpush2.msra.mxu0 0.0
        %1605 = vmatprep.subr.mxu0 0.0
        %1606 = vmatpush2.msra.mxu0 0.0
        %1607 = vmatprep.subr.mxu0 0.0
        %1608 = vmatpush2.msra.mxu0 0.0
        %1609 = vmatprep.subr.mxu0 0.0
        %1610 = vmatpush2.msra.mxu0 0.0
        %1611 = vmatprep.subr.mxu0 0.0
        %1612 = vmatpush2.msra.mxu0 0.0
        %1613 = vmatprep.subr.mxu0 0.0
        %1614 = vmatpush2.msra.mxu0 0.0
        %1615 = vmatprep.subr.mxu0 0.0
        %1616 = vmatpush2.msra.mxu0 0.0
        %1617 = vmatprep.subr.mxu0 0.0
        %1618 = vmatpush2.msra.mxu0 0.0
        %1619 = vmatprep.subr.mxu0 0.0
        %1620 = vmatpush2.msra.mxu0 0.0
        %1621 = vmatprep.subr.mxu0 0.0
        %1622 = vmatpush2.msra.mxu0 0.0
        %1623 = vmatprep.subr.mxu0 0.0
        %1624 = vmatpush2.msra.mxu0 0.0
        %1625 = vmatprep.mubr.f32.mxu0 0.0
        %v1626 = vand.u32 %v981, 4294901760
        %1627 = vmatmul.mubr.f32.gmra.mxu0 %v1626
        %v1628 = vpop.f32.mrf.mxu0
        %v1629 = vadd.f32 %v1486, %v1628
        %v1630 = vpop.f32.mrf.mxu0
        %1631 = vmatprep.mubr.f32.mxu0 0.0
        %v1632 = vand.u32 %v982, 4294901760
        %1633 = vmatmul.mubr.f32.gmra.mxu0 %v1632
        %v1634 = vpop.f32.mrf.mxu0
        %v1635 = vadd.f32 %v1494, %v1634
        %v1636 = vpop.f32.mrf.mxu0
        %1637 = vmatprep.mubr.f32.mxu0 0.0
        %v1638 = vand.u32 %v983, 4294901760
        %1639 = vmatmul.mubr.f32.gmra.mxu0 %v1638
        %v1640 = vpop.f32.mrf.mxu0
        %v1641 = vadd.f32 %v1502, %v1640
        %v1642 = vpop.f32.mrf.mxu0
        %1643 = vmatprep.mubr.f32.mxu0 0.0
        %v1644 = vand.u32 %v984, 4294901760
        %1645 = vmatmul.mubr.f32.gmra.mxu0 %v1644
        %v1646 = vpop.f32.mrf.mxu0
        %v1647 = vadd.f32 %v1510, %v1646
        %v1648 = vpop.f32.mrf.mxu0
        %1649 = vdwg.mxu0
        %1650 = vmatprep.subr.mxu0 0.0
        %v1651 = vand.u32 %v198, 4294901760
        %1652 = vmatpush1.msra.mxu0 %v1651
        %1653 = vmatprep.subr.mxu0 0.0
        %v1654 = vand.u32 %v197, 4294901760
        %1655 = vmatpush1.msra.mxu0 %v1654
        %1656 = vmatprep.subr.mxu0 0.0
        %v1657 = vand.u32 %v196, 4294901760
        %1658 = vmatpush1.msra.mxu0 %v1657
        %1659 = vmatprep.subr.mxu0 0.0
        %v1660 = vand.u32 %v195, 4294901760
        %1661 = vmatpush1.msra.mxu0 %v1660
        %1662 = vmatprep.subr.mxu0 0.0
        %v1663 = vand.u32 %v194, 4294901760
        %1664 = vmatpush1.msra.mxu0 %v1663
        %1665 = vmatprep.subr.mxu0 0.0
        %v1666 = vand.u32 %v193, 4294901760
        %1667 = vmatpush1.msra.mxu0 %v1666
        %1668 = vmatprep.subr.mxu0 0.0
        %v1669 = vand.u32 %v192, 4294901760
        %1670 = vmatpush1.msra.mxu0 %v1669
        %1671 = vmatprep.subr.mxu0 0.0
        %v1672 = vand.u32 %v191, 4294901760
        %1673 = vmatpush1.msra.mxu0 %v1672
        %1674 = vmatprep.subr.mxu0 0.0
        %v1675 = vand.u32 %v190, 4294901760
        %1676 = vmatpush1.msra.mxu0 %v1675
        %1677 = vmatprep.subr.mxu0 0.0
        %v1678 = vand.u32 %v189, 4294901760
        %1679 = vmatpush1.msra.mxu0 %v1678
        %1680 = vmatprep.subr.mxu0 0.0
        %v1681 = vand.u32 %v188, 4294901760
        %1682 = vmatpush1.msra.mxu0 %v1681
        %1683 = vmatprep.subr.mxu0 0.0
        %v1684 = vand.u32 %v187, 4294901760
        %1685 = vmatpush1.msra.mxu0 %v1684
        %1686 = vmatprep.subr.mxu0 0.0
        %v1687 = vand.u32 %v186, 4294901760
        %1688 = vmatpush1.msra.mxu0 %v1687
        %1689 = vmatprep.subr.mxu0 0.0
        %v1690 = vand.u32 %v185, 4294901760
        %1691 = vmatpush1.msra.mxu0 %v1690
        %1692 = vmatprep.subr.mxu0 0.0
        %v1693 = vand.u32 %v184, 4294901760
        %1694 = vmatpush1.msra.mxu0 %v1693
        %1695 = vmatprep.subr.mxu0 0.0
        %v1696 = vand.u32 %v183, 4294901760
        %1697 = vmatpush1.msra.mxu0 %v1696
        %1698 = vmatprep.subr.mxu0 0.0
        %1699 = vmatpush2.msra.mxu0 0.0
        %1700 = vmatprep.subr.mxu0 0.0
        %1701 = vmatpush2.msra.mxu0 0.0
        %1702 = vmatprep.subr.mxu0 0.0
        %1703 = vmatpush2.msra.mxu0 0.0
        %1704 = vmatprep.subr.mxu0 0.0
        %1705 = vmatpush2.msra.mxu0 0.0
        %1706 = vmatprep.subr.mxu0 0.0
        %1707 = vmatpush2.msra.mxu0 0.0
        %1708 = vmatprep.subr.mxu0 0.0
        %1709 = vmatpush2.msra.mxu0 0.0
        %1710 = vmatprep.subr.mxu0 0.0
        %1711 = vmatpush2.msra.mxu0 0.0
        %1712 = vmatprep.subr.mxu0 0.0
        %1713 = vmatpush2.msra.mxu0 0.0
        %1714 = vmatprep.subr.mxu0 0.0
        %1715 = vmatpush2.msra.mxu0 0.0
        %1716 = vmatprep.subr.mxu0 0.0
        %1717 = vmatpush2.msra.mxu0 0.0
        %1718 = vmatprep.subr.mxu0 0.0
        %1719 = vmatpush2.msra.mxu0 0.0
        %1720 = vmatprep.subr.mxu0 0.0
        %1721 = vmatpush2.msra.mxu0 0.0
        %1722 = vmatprep.subr.mxu0 0.0
        %1723 = vmatpush2.msra.mxu0 0.0
        %1724 = vmatprep.subr.mxu0 0.0
        %1725 = vmatpush2.msra.mxu0 0.0
        %1726 = vmatprep.subr.mxu0 0.0
        %1727 = vmatpush2.msra.mxu0 0.0
        %1728 = vmatprep.subr.mxu0 0.0
        %1729 = vmatpush2.msra.mxu0 0.0
        %1730 = vmatprep.mubr.f32.mxu0 0.0
        %v1731 = vand.u32 %v981, 4294901760
        %1732 = vmatmul.mubr.f32.gmra.mxu0 %v1731
        %v1733 = vpop.f32.mrf.mxu0
        %v1734 = vadd.f32 %v1629, %v1733
        %v1735 = vpop.f32.mrf.mxu0
        %1736 = vmatprep.mubr.f32.mxu0 0.0
        %v1737 = vand.u32 %v982, 4294901760
        %1738 = vmatmul.mubr.f32.gmra.mxu0 %v1737
        %v1739 = vpop.f32.mrf.mxu0
        %v1740 = vadd.f32 %v1635, %v1739
        %v1741 = vpop.f32.mrf.mxu0
        %1742 = vmatprep.mubr.f32.mxu0 0.0
        %v1743 = vand.u32 %v983, 4294901760
        %1744 = vmatmul.mubr.f32.gmra.mxu0 %v1743
        %v1745 = vpop.f32.mrf.mxu0
        %v1746 = vadd.f32 %v1641, %v1745
        %v1747 = vpop.f32.mrf.mxu0
        %1748 = vmatprep.mubr.f32.mxu0 0.0
        %v1749 = vand.u32 %v984, 4294901760
        %1750 = vmatmul.mubr.f32.gmra.mxu0 %v1749
        %v1751 = vpop.f32.mrf.mxu0
        %v1752 = vadd.f32 %v1647, %v1751
        %v1753 = vpop.f32.mrf.mxu0
        %1754 = vdwg.mxu0
        %v1755 = vmul.f32 %v1734, 0.06666667
        %v1756 = vmul.f32 %v1740, 0.06666667
        %v1757 = vmul.f32 %v1746, 0.06666667
        %v1758 = vmul.f32 %v1752, 0.06666667
        %v1759 = vrsqrt.pop %v1755
        %v1760 = vrsqrt.pop %v1756
        %v1761 = vrsqrt.pop %v1757
        %v1762 = vrsqrt.pop %v1758
        %v1763 = vmul.f32 %v977, %v1759
        %v1764 = vmul.f32 %v978, %v1760
        %v1765 = vmul.f32 %v979, %v1761
        %v1766 = vmul.f32 %v980, %v1762
        %v1767 = vxor.u32 %v1763, 2147483648
        %v1768 = vxor.u32 %v1764, 2147483648
        %v1769 = vxor.u32 %v1765, 2147483648
        %v1770 = vxor.u32 %v1766, 2147483648
        %v1771 = vmul.f32 %v1767, 1.442695
        %v1772 = vpow.pop %v1771
        %v1773 = vmul.f32 %v1768, 1.442695
        %v1774 = vpow.pop %v1773
        %v1775 = vmul.f32 %v1769, 1.442695
        %v1776 = vpow.pop %v1775
        %v1777 = vmul.f32 %v1770, 1.442695
        %v1778 = vpow.pop %v1777
        %v1779 = vadd.f32 %v1772, 1.0
        %v1780 = vadd.f32 %v1774, 1.0
        %v1781 = vadd.f32 %v1776, 1.0
        %v1782 = vadd.f32 %v1778, 1.0
        %v1783 = vrcp.pop %v1779
        %v1784 = vmul.f32 1.0, %v1783
        %v1785 = vrcp.pop %v1780
        %v1786 = vmul.f32 1.0, %v1785
        %v1787 = vrcp.pop %v1781
        %v1788 = vmul.f32 1.0, %v1787
        %v1789 = vrcp.pop %v1782
        %v1790 = vmul.f32 1.0, %v1789
        %1791 = vmatprep.subr.mxu0 0.0
        %v1792 = vand.u32 %v198, 4294901760
        %1793 = vmatpush1.msra.mxu0 %v1792
        %1794 = vmatprep.subr.mxu0 0.0
        %v1795 = vand.u32 %v197, 4294901760
        %1796 = vmatpush1.msra.mxu0 %v1795
        %1797 = vmatprep.subr.mxu0 0.0
        %v1798 = vand.u32 %v196, 4294901760
        %1799 = vmatpush1.msra.mxu0 %v1798
        %1800 = vmatprep.subr.mxu0 0.0
        %v1801 = vand.u32 %v195, 4294901760
        %1802 = vmatpush1.msra.mxu0 %v1801
        %1803 = vmatprep.subr.mxu0 0.0
        %v1804 = vand.u32 %v194, 4294901760
        %1805 = vmatpush1.msra.mxu0 %v1804
        %1806 = vmatprep.subr.mxu0 0.0
        %v1807 = vand.u32 %v193, 4294901760
        %1808 = vmatpush1.msra.mxu0 %v1807
        %1809 = vmatprep.subr.mxu0 0.0
        %v1810 = vand.u32 %v192, 4294901760
        %1811 = vmatpush1.msra.mxu0 %v1810
        %1812 = vmatprep.subr.mxu0 0.0
        %v1813 = vand.u32 %v191, 4294901760
        %1814 = vmatpush1.msra.mxu0 %v1813
        %1815 = vmatprep.subr.mxu0 0.0
        %v1816 = vand.u32 %v190, 4294901760
        %1817 = vmatpush1.msra.mxu0 %v1816
        %1818 = vmatprep.subr.mxu0 0.0
        %v1819 = vand.u32 %v189, 4294901760
        %1820 = vmatpush1.msra.mxu0 %v1819
        %1821 = vmatprep.subr.mxu0 0.0
        %v1822 = vand.u32 %v188, 4294901760
        %1823 = vmatpush1.msra.mxu0 %v1822
        %1824 = vmatprep.subr.mxu0 0.0
        %v1825 = vand.u32 %v187, 4294901760
        %1826 = vmatpush1.msra.mxu0 %v1825
        %1827 = vmatprep.subr.mxu0 0.0
        %v1828 = vand.u32 %v186, 4294901760
        %1829 = vmatpush1.msra.mxu0 %v1828
        %1830 = vmatprep.subr.mxu0 0.0
        %v1831 = vand.u32 %v185, 4294901760
        %1832 = vmatpush1.msra.mxu0 %v1831
        %1833 = vmatprep.subr.mxu0 0.0
        %v1834 = vand.u32 %v184, 4294901760
        %1835 = vmatpush1.msra.mxu0 %v1834
        %1836 = vmatprep.subr.mxu0 0.0
        %v1837 = vand.u32 %v183, 4294901760
        %1838 = vmatpush1.msra.mxu0 %v1837
        %1839 = vmatprep.subr.mxu0 0.0
        %1840 = vmatpush2.msra.mxu0 0.0
        %1841 = vmatprep.subr.mxu0 0.0
        %1842 = vmatpush2.msra.mxu0 0.0
        %1843 = vmatprep.subr.mxu0 0.0
        %1844 = vmatpush2.msra.mxu0 0.0
        %1845 = vmatprep.subr.mxu0 0.0
        %1846 = vmatpush2.msra.mxu0 0.0
        %1847 = vmatprep.subr.mxu0 0.0
        %1848 = vmatpush2.msra.mxu0 0.0
        %1849 = vmatprep.subr.mxu0 0.0
        %1850 = vmatpush2.msra.mxu0 0.0
        %1851 = vmatprep.subr.mxu0 0.0
        %1852 = vmatpush2.msra.mxu0 0.0
        %1853 = vmatprep.subr.mxu0 0.0
        %1854 = vmatpush2.msra.mxu0 0.0
        %1855 = vmatprep.subr.mxu0 0.0
        %1856 = vmatpush2.msra.mxu0 0.0
        %1857 = vmatprep.subr.mxu0 0.0
        %1858 = vmatpush2.msra.mxu0 0.0
        %1859 = vmatprep.subr.mxu0 0.0
        %1860 = vmatpush2.msra.mxu0 0.0
        %1861 = vmatprep.subr.mxu0 0.0
        %1862 = vmatpush2.msra.mxu0 0.0
        %1863 = vmatprep.subr.mxu0 0.0
        %1864 = vmatpush2.msra.mxu0 0.0
        %1865 = vmatprep.subr.mxu0 0.0
        %1866 = vmatpush2.msra.mxu0 0.0
        %1867 = vmatprep.subr.mxu0 0.0
        %1868 = vmatpush2.msra.mxu0 0.0
        %1869 = vmatprep.subr.mxu0 0.0
        %1870 = vmatpush2.msra.mxu0 0.0
        %1871 = vmatprep.mubr.f32.mxu0 0.0
        %v1872 = vand.u32 %v179, 4294901760
        %v1873 = vsub.f32 %v179, %v1872
        %v1874 = vand.u32 %v1873, 4294901760
        %v1875 = vsub.f32 %v1873, %v1874
        %v1876 = vand.u32 %v1875, 4294901760
        %1877 = vmatmul.mubr.f32.gmra.mxu0 %v1876
        %v1878 = vpop.f32.mrf.mxu0
        %v1879 = vadd.f32 0.0, %v1878
        %v1880 = vpop.f32.mrf.mxu0
        %1881 = vmatprep.mubr.f32.mxu0 0.0
        %v1882 = vand.u32 %v180, 4294901760
        %v1883 = vsub.f32 %v180, %v1882
        %v1884 = vand.u32 %v1883, 4294901760
        %v1885 = vsub.f32 %v1883, %v1884
        %v1886 = vand.u32 %v1885, 4294901760
        %1887 = vmatmul.mubr.f32.gmra.mxu0 %v1886
        %v1888 = vpop.f32.mrf.mxu0
        %v1889 = vadd.f32 0.0, %v1888
        %v1890 = vpop.f32.mrf.mxu0
        %1891 = vmatprep.mubr.f32.mxu0 0.0
        %v1892 = vand.u32 %v181, 4294901760
        %v1893 = vsub.f32 %v181, %v1892
        %v1894 = vand.u32 %v1893, 4294901760
        %v1895 = vsub.f32 %v1893, %v1894
        %v1896 = vand.u32 %v1895, 4294901760
        %1897 = vmatmul.mubr.f32.gmra.mxu0 %v1896
        %v1898 = vpop.f32.mrf.mxu0
        %v1899 = vadd.f32 0.0, %v1898
        %v1900 = vpop.f32.mrf.mxu0
        %1901 = vmatprep.mubr.f32.mxu0 0.0
        %v1902 = vand.u32 %v182, 4294901760
        %v1903 = vsub.f32 %v182, %v1902
        %v1904 = vand.u32 %v1903, 4294901760
        %v1905 = vsub.f32 %v1903, %v1904
        %v1906 = vand.u32 %v1905, 4294901760
        %1907 = vmatmul.mubr.f32.gmra.mxu0 %v1906
        %v1908 = vpop.f32.mrf.mxu0
        %v1909 = vadd.f32 0.0, %v1908
        %v1910 = vpop.f32.mrf.mxu0
        %1911 = vdwg.mxu0
        %1912 = vmatprep.subr.mxu0 0.0
        %v1913 = vand.u32 %v198, 4294901760
        %v1914 = vsub.f32 %v198, %v1913
        %v1915 = vand.u32 %v1914, 4294901760
        %v1916 = vsub.f32 %v1914, %v1915
        %v1917 = vand.u32 %v1916, 4294901760
        %1918 = vmatpush1.msra.mxu0 %v1917
        %1919 = vmatprep.subr.mxu0 0.0
        %v1920 = vand.u32 %v197, 4294901760
        %v1921 = vsub.f32 %v197, %v1920
        %v1922 = vand.u32 %v1921, 4294901760
        %v1923 = vsub.f32 %v1921, %v1922
        %v1924 = vand.u32 %v1923, 4294901760
        %1925 = vmatpush1.msra.mxu0 %v1924
        %1926 = vmatprep.subr.mxu0 0.0
        %v1927 = vand.u32 %v196, 4294901760
        %v1928 = vsub.f32 %v196, %v1927
        %v1929 = vand.u32 %v1928, 4294901760
        %v1930 = vsub.f32 %v1928, %v1929
        %v1931 = vand.u32 %v1930, 4294901760
        %1932 = vmatpush1.msra.mxu0 %v1931
        %1933 = vmatprep.subr.mxu0 0.0
        %v1934 = vand.u32 %v195, 4294901760
        %v1935 = vsub.f32 %v195, %v1934
        %v1936 = vand.u32 %v1935, 4294901760
        %v1937 = vsub.f32 %v1935, %v1936
        %v1938 = vand.u32 %v1937, 4294901760
        %1939 = vmatpush1.msra.mxu0 %v1938
        %1940 = vmatprep.subr.mxu0 0.0
        %v1941 = vand.u32 %v194, 4294901760
        %v1942 = vsub.f32 %v194, %v1941
        %v1943 = vand.u32 %v1942, 4294901760
        %v1944 = vsub.f32 %v1942, %v1943
        %v1945 = vand.u32 %v1944, 4294901760
        %1946 = vmatpush1.msra.mxu0 %v1945
        %1947 = vmatprep.subr.mxu0 0.0
        %v1948 = vand.u32 %v193, 4294901760
        %v1949 = vsub.f32 %v193, %v1948
        %v1950 = vand.u32 %v1949, 4294901760
        %v1951 = vsub.f32 %v1949, %v1950
        %v1952 = vand.u32 %v1951, 4294901760
        %1953 = vmatpush1.msra.mxu0 %v1952
        %1954 = vmatprep.subr.mxu0 0.0
        %v1955 = vand.u32 %v192, 4294901760
        %v1956 = vsub.f32 %v192, %v1955
        %v1957 = vand.u32 %v1956, 4294901760
        %v1958 = vsub.f32 %v1956, %v1957
        %v1959 = vand.u32 %v1958, 4294901760
        %1960 = vmatpush1.msra.mxu0 %v1959
        %1961 = vmatprep.subr.mxu0 0.0
        %v1962 = vand.u32 %v191, 4294901760
        %v1963 = vsub.f32 %v191, %v1962
        %v1964 = vand.u32 %v1963, 4294901760
        %v1965 = vsub.f32 %v1963, %v1964
        %v1966 = vand.u32 %v1965, 4294901760
        %1967 = vmatpush1.msra.mxu0 %v1966
        %1968 = vmatprep.subr.mxu0 0.0
        %v1969 = vand.u32 %v190, 4294901760
        %v1970 = vsub.f32 %v190, %v1969
        %v1971 = vand.u32 %v1970, 4294901760
        %v1972 = vsub.f32 %v1970, %v1971
        %v1973 = vand.u32 %v1972, 4294901760
        %1974 = vmatpush1.msra.mxu0 %v1973
        %1975 = vmatprep.subr.mxu0 0.0
        %v1976 = vand.u32 %v189, 4294901760
        %v1977 = vsub.f32 %v189, %v1976
        %v1978 = vand.u32 %v1977, 4294901760
        %v1979 = vsub.f32 %v1977, %v1978
        %v1980 = vand.u32 %v1979, 4294901760
        %1981 = vmatpush1.msra.mxu0 %v1980
        %1982 = vmatprep.subr.mxu0 0.0
        %v1983 = vand.u32 %v188, 4294901760
        %v1984 = vsub.f32 %v188, %v1983
        %v1985 = vand.u32 %v1984, 4294901760
        %v1986 = vsub.f32 %v1984, %v1985
        %v1987 = vand.u32 %v1986, 4294901760
        %1988 = vmatpush1.msra.mxu0 %v1987
        %1989 = vmatprep.subr.mxu0 0.0
        %v1990 = vand.u32 %v187, 4294901760
        %v1991 = vsub.f32 %v187, %v1990
        %v1992 = vand.u32 %v1991, 4294901760
        %v1993 = vsub.f32 %v1991, %v1992
        %v1994 = vand.u32 %v1993, 4294901760
        %1995 = vmatpush1.msra.mxu0 %v1994
        %1996 = vmatprep.subr.mxu0 0.0
        %v1997 = vand.u32 %v186, 4294901760
        %v1998 = vsub.f32 %v186, %v1997
        %v1999 = vand.u32 %v1998, 4294901760
        %v2000 = vsub.f32 %v1998, %v1999
        %v2001 = vand.u32 %v2000, 4294901760
        %2002 = vmatpush1.msra.mxu0 %v2001
        %2003 = vmatprep.subr.mxu0 0.0
        %v2004 = vand.u32 %v185, 4294901760
        %v2005 = vsub.f32 %v185, %v2004
        %v2006 = vand.u32 %v2005, 4294901760
        %v2007 = vsub.f32 %v2005, %v2006
        %v2008 = vand.u32 %v2007, 4294901760
        %2009 = vmatpush1.msra.mxu0 %v2008
        %2010 = vmatprep.subr.mxu0 0.0
        %v2011 = vand.u32 %v184, 4294901760
        %v2012 = vsub.f32 %v184, %v2011
        %v2013 = vand.u32 %v2012, 4294901760
        %v2014 = vsub.f32 %v2012, %v2013
        %v2015 = vand.u32 %v2014, 4294901760
        %2016 = vmatpush1.msra.mxu0 %v2015
        %2017 = vmatprep.subr.mxu0 0.0
        %v2018 = vand.u32 %v183, 4294901760
        %v2019 = vsub.f32 %v183, %v2018
        %v2020 = vand.u32 %v2019, 4294901760
        %v2021 = vsub.f32 %v2019, %v2020
        %v2022 = vand.u32 %v2021, 4294901760
        %2023 = vmatpush1.msra.mxu0 %v2022
        %2024 = vmatprep.subr.mxu0 0.0
        %2025 = vmatpush2.msra.mxu0 0.0
        %2026 = vmatprep.subr.mxu0 0.0
        %2027 = vmatpush2.msra.mxu0 0.0
        %2028 = vmatprep.subr.mxu0 0.0
        %2029 = vmatpush2.msra.mxu0 0.0
        %2030 = vmatprep.subr.mxu0 0.0
        %2031 = vmatpush2.msra.mxu0 0.0
        %2032 = vmatprep.subr.mxu0 0.0
        %2033 = vmatpush2.msra.mxu0 0.0
        %2034 = vmatprep.subr.mxu0 0.0
        %2035 = vmatpush2.msra.mxu0 0.0
        %2036 = vmatprep.subr.mxu0 0.0
        %2037 = vmatpush2.msra.mxu0 0.0
        %2038 = vmatprep.subr.mxu0 0.0
        %2039 = vmatpush2.msra.mxu0 0.0
        %2040 = vmatprep.subr.mxu0 0.0
        %2041 = vmatpush2.msra.mxu0 0.0
        %2042 = vmatprep.subr.mxu0 0.0
        %2043 = vmatpush2.msra.mxu0 0.0
        %2044 = vmatprep.subr.mxu0 0.0
        %2045 = vmatpush2.msra.mxu0 0.0
        %2046 = vmatprep.subr.mxu0 0.0
        %2047 = vmatpush2.msra.mxu0 0.0
        %2048 = vmatprep.subr.mxu0 0.0
        %2049 = vmatpush2.msra.mxu0 0.0
        %2050 = vmatprep.subr.mxu0 0.0
        %2051 = vmatpush2.msra.mxu0 0.0
        %2052 = vmatprep.subr.mxu0 0.0
        %2053 = vmatpush2.msra.mxu0 0.0
        %2054 = vmatprep.subr.mxu0 0.0
        %2055 = vmatpush2.msra.mxu0 0.0
        %2056 = vmatprep.mubr.f32.mxu0 0.0
        %v2057 = vand.u32 %v179, 4294901760
        %2058 = vmatmul.mubr.f32.gmra.mxu0 %v2057
        %v2059 = vpop.f32.mrf.mxu0
        %v2060 = vadd.f32 %v1879, %v2059
        %v2061 = vpop.f32.mrf.mxu0
        %2062 = vmatprep.mubr.f32.mxu0 0.0
        %v2063 = vand.u32 %v180, 4294901760
        %2064 = vmatmul.mubr.f32.gmra.mxu0 %v2063
        %v2065 = vpop.f32.mrf.mxu0
        %v2066 = vadd.f32 %v1889, %v2065
        %v2067 = vpop.f32.mrf.mxu0
        %2068 = vmatprep.mubr.f32.mxu0 0.0
        %v2069 = vand.u32 %v181, 4294901760
        %2070 = vmatmul.mubr.f32.gmra.mxu0 %v2069
        %v2071 = vpop.f32.mrf.mxu0
        %v2072 = vadd.f32 %v1899, %v2071
        %v2073 = vpop.f32.mrf.mxu0
        %2074 = vmatprep.mubr.f32.mxu0 0.0
        %v2075 = vand.u32 %v182, 4294901760
        %2076 = vmatmul.mubr.f32.gmra.mxu0 %v2075
        %v2077 = vpop.f32.mrf.mxu0
        %v2078 = vadd.f32 %v1909, %v2077
        %v2079 = vpop.f32.mrf.mxu0
        %2080 = vdwg.mxu0
        %2081 = vmatprep.subr.mxu0 0.0
        %v2082 = vand.u32 %v198, 4294901760
        %v2083 = vsub.f32 %v198, %v2082
        %2084 = vmatpush1.msra.mxu0 %v2083
        %2085 = vmatprep.subr.mxu0 0.0
        %v2086 = vand.u32 %v197, 4294901760
        %v2087 = vsub.f32 %v197, %v2086
        %2088 = vmatpush1.msra.mxu0 %v2087
        %2089 = vmatprep.subr.mxu0 0.0
        %v2090 = vand.u32 %v196, 4294901760
        %v2091 = vsub.f32 %v196, %v2090
        %2092 = vmatpush1.msra.mxu0 %v2091
        %2093 = vmatprep.subr.mxu0 0.0
        %v2094 = vand.u32 %v195, 4294901760
        %v2095 = vsub.f32 %v195, %v2094
        %2096 = vmatpush1.msra.mxu0 %v2095
        %2097 = vmatprep.subr.mxu0 0.0
        %v2098 = vand.u32 %v194, 4294901760
        %v2099 = vsub.f32 %v194, %v2098
        %2100 = vmatpush1.msra.mxu0 %v2099
        %2101 = vmatprep.subr.mxu0 0.0
        %v2102 = vand.u32 %v193, 4294901760
        %v2103 = vsub.f32 %v193, %v2102
        %2104 = vmatpush1.msra.mxu0 %v2103
        %2105 = vmatprep.subr.mxu0 0.0
        %v2106 = vand.u32 %v192, 4294901760
        %v2107 = vsub.f32 %v192, %v2106
        %2108 = vmatpush1.msra.mxu0 %v2107
        %2109 = vmatprep.subr.mxu0 0.0
        %v2110 = vand.u32 %v191, 4294901760
        %v2111 = vsub.f32 %v191, %v2110
        %2112 = vmatpush1.msra.mxu0 %v2111
        %2113 = vmatprep.subr.mxu0 0.0
        %v2114 = vand.u32 %v190, 4294901760
        %v2115 = vsub.f32 %v190, %v2114
        %2116 = vmatpush1.msra.mxu0 %v2115
        %2117 = vmatprep.subr.mxu0 0.0
        %v2118 = vand.u32 %v189, 4294901760
        %v2119 = vsub.f32 %v189, %v2118
        %2120 = vmatpush1.msra.mxu0 %v2119
        %2121 = vmatprep.subr.mxu0 0.0
        %v2122 = vand.u32 %v188, 4294901760
        %v2123 = vsub.f32 %v188, %v2122
        %2124 = vmatpush1.msra.mxu0 %v2123
        %2125 = vmatprep.subr.mxu0 0.0
        %v2126 = vand.u32 %v187, 4294901760
        %v2127 = vsub.f32 %v187, %v2126
        %2128 = vmatpush1.msra.mxu0 %v2127
        %2129 = vmatprep.subr.mxu0 0.0
        %v2130 = vand.u32 %v186, 4294901760
        %v2131 = vsub.f32 %v186, %v2130
        %2132 = vmatpush1.msra.mxu0 %v2131
        %2133 = vmatprep.subr.mxu0 0.0
        %v2134 = vand.u32 %v185, 4294901760
        %v2135 = vsub.f32 %v185, %v2134
        %2136 = vmatpush1.msra.mxu0 %v2135
        %2137 = vmatprep.subr.mxu0 0.0
        %v2138 = vand.u32 %v184, 4294901760
        %v2139 = vsub.f32 %v184, %v2138
        %2140 = vmatpush1.msra.mxu0 %v2139
        %2141 = vmatprep.subr.mxu0 0.0
        %v2142 = vand.u32 %v183, 4294901760
        %v2143 = vsub.f32 %v183, %v2142
        %2144 = vmatpush1.msra.mxu0 %v2143
        %2145 = vmatprep.subr.mxu0 0.0
        %2146 = vmatpush2.msra.mxu0 0.0
        %2147 = vmatprep.subr.mxu0 0.0
        %2148 = vmatpush2.msra.mxu0 0.0
        %2149 = vmatprep.subr.mxu0 0.0
        %2150 = vmatpush2.msra.mxu0 0.0
        %2151 = vmatprep.subr.mxu0 0.0
        %2152 = vmatpush2.msra.mxu0 0.0
        %2153 = vmatprep.subr.mxu0 0.0
        %2154 = vmatpush2.msra.mxu0 0.0
        %2155 = vmatprep.subr.mxu0 0.0
        %2156 = vmatpush2.msra.mxu0 0.0
        %2157 = vmatprep.subr.mxu0 0.0
        %2158 = vmatpush2.msra.mxu0 0.0
        %2159 = vmatprep.subr.mxu0 0.0
        %2160 = vmatpush2.msra.mxu0 0.0
        %2161 = vmatprep.subr.mxu0 0.0
        %2162 = vmatpush2.msra.mxu0 0.0
        %2163 = vmatprep.subr.mxu0 0.0
        %2164 = vmatpush2.msra.mxu0 0.0
        %2165 = vmatprep.subr.mxu0 0.0
        %2166 = vmatpush2.msra.mxu0 0.0
        %2167 = vmatprep.subr.mxu0 0.0
        %2168 = vmatpush2.msra.mxu0 0.0
        %2169 = vmatprep.subr.mxu0 0.0
        %2170 = vmatpush2.msra.mxu0 0.0
        %2171 = vmatprep.subr.mxu0 0.0
        %2172 = vmatpush2.msra.mxu0 0.0
        %2173 = vmatprep.subr.mxu0 0.0
        %2174 = vmatpush2.msra.mxu0 0.0
        %2175 = vmatprep.subr.mxu0 0.0
        %2176 = vmatpush2.msra.mxu0 0.0
        %2177 = vmatprep.mubr.f32.mxu0 0.0
        %v2178 = vand.u32 %v179, 4294901760
        %v2179 = vsub.f32 %v179, %v2178
        %2180 = vmatmul.mubr.f32.gmra.mxu0 %v2179
        %v2181 = vpop.f32.mrf.mxu0
        %v2182 = vadd.f32 %v2060, %v2181
        %v2183 = vpop.f32.mrf.mxu0
        %2184 = vmatprep.mubr.f32.mxu0 0.0
        %v2185 = vand.u32 %v180, 4294901760
        %v2186 = vsub.f32 %v180, %v2185
        %2187 = vmatmul.mubr.f32.gmra.mxu0 %v2186
        %v2188 = vpop.f32.mrf.mxu0
        %v2189 = vadd.f32 %v2066, %v2188
        %v2190 = vpop.f32.mrf.mxu0
        %2191 = vmatprep.mubr.f32.mxu0 0.0
        %v2192 = vand.u32 %v181, 4294901760
        %v2193 = vsub.f32 %v181, %v2192
        %2194 = vmatmul.mubr.f32.gmra.mxu0 %v2193
        %v2195 = vpop.f32.mrf.mxu0
        %v2196 = vadd.f32 %v2072, %v2195
        %v2197 = vpop.f32.mrf.mxu0
        %2198 = vmatprep.mubr.f32.mxu0 0.0
        %v2199 = vand.u32 %v182, 4294901760
        %v2200 = vsub.f32 %v182, %v2199
        %2201 = vmatmul.mubr.f32.gmra.mxu0 %v2200
        %v2202 = vpop.f32.mrf.mxu0
        %v2203 = vadd.f32 %v2078, %v2202
        %v2204 = vpop.f32.mrf.mxu0
        %2205 = vdwg.mxu0
        %2206 = vmatprep.subr.mxu0 0.0
        %v2207 = vand.u32 %v198, 4294901760
        %2208 = vmatpush1.msra.mxu0 %v2207
        %2209 = vmatprep.subr.mxu0 0.0
        %v2210 = vand.u32 %v197, 4294901760
        %2211 = vmatpush1.msra.mxu0 %v2210
        %2212 = vmatprep.subr.mxu0 0.0
        %v2213 = vand.u32 %v196, 4294901760
        %2214 = vmatpush1.msra.mxu0 %v2213
        %2215 = vmatprep.subr.mxu0 0.0
        %v2216 = vand.u32 %v195, 4294901760
        %2217 = vmatpush1.msra.mxu0 %v2216
        %2218 = vmatprep.subr.mxu0 0.0
        %v2219 = vand.u32 %v194, 4294901760
        %2220 = vmatpush1.msra.mxu0 %v2219
        %2221 = vmatprep.subr.mxu0 0.0
        %v2222 = vand.u32 %v193, 4294901760
        %2223 = vmatpush1.msra.mxu0 %v2222
        %2224 = vmatprep.subr.mxu0 0.0
        %v2225 = vand.u32 %v192, 4294901760
        %2226 = vmatpush1.msra.mxu0 %v2225
        %2227 = vmatprep.subr.mxu0 0.0
        %v2228 = vand.u32 %v191, 4294901760
        %2229 = vmatpush1.msra.mxu0 %v2228
        %2230 = vmatprep.subr.mxu0 0.0
        %v2231 = vand.u32 %v190, 4294901760
        %2232 = vmatpush1.msra.mxu0 %v2231
        %2233 = vmatprep.subr.mxu0 0.0
        %v2234 = vand.u32 %v189, 4294901760
        %2235 = vmatpush1.msra.mxu0 %v2234
        %2236 = vmatprep.subr.mxu0 0.0
        %v2237 = vand.u32 %v188, 4294901760
        %2238 = vmatpush1.msra.mxu0 %v2237
        %2239 = vmatprep.subr.mxu0 0.0
        %v2240 = vand.u32 %v187, 4294901760
        %2241 = vmatpush1.msra.mxu0 %v2240
        %2242 = vmatprep.subr.mxu0 0.0
        %v2243 = vand.u32 %v186, 4294901760
        %2244 = vmatpush1.msra.mxu0 %v2243
        %2245 = vmatprep.subr.mxu0 0.0
        %v2246 = vand.u32 %v185, 4294901760
        %2247 = vmatpush1.msra.mxu0 %v2246
        %2248 = vmatprep.subr.mxu0 0.0
        %v2249 = vand.u32 %v184, 4294901760
        %2250 = vmatpush1.msra.mxu0 %v2249
        %2251 = vmatprep.subr.mxu0 0.0
        %v2252 = vand.u32 %v183, 4294901760
        %2253 = vmatpush1.msra.mxu0 %v2252
        %2254 = vmatprep.subr.mxu0 0.0
        %2255 = vmatpush2.msra.mxu0 0.0
        %2256 = vmatprep.subr.mxu0 0.0
        %2257 = vmatpush2.msra.mxu0 0.0
        %2258 = vmatprep.subr.mxu0 0.0
        %2259 = vmatpush2.msra.mxu0 0.0
        %2260 = vmatprep.subr.mxu0 0.0
        %2261 = vmatpush2.msra.mxu0 0.0
        %2262 = vmatprep.subr.mxu0 0.0
        %2263 = vmatpush2.msra.mxu0 0.0
        %2264 = vmatprep.subr.mxu0 0.0
        %2265 = vmatpush2.msra.mxu0 0.0
        %2266 = vmatprep.subr.mxu0 0.0
        %2267 = vmatpush2.msra.mxu0 0.0
        %2268 = vmatprep.subr.mxu0 0.0
        %2269 = vmatpush2.msra.mxu0 0.0
        %2270 = vmatprep.subr.mxu0 0.0
        %2271 = vmatpush2.msra.mxu0 0.0
        %2272 = vmatprep.subr.mxu0 0.0
        %2273 = vmatpush2.msra.mxu0 0.0
        %2274 = vmatprep.subr.mxu0 0.0
        %2275 = vmatpush2.msra.mxu0 0.0
        %2276 = vmatprep.subr.mxu0 0.0
        %2277 = vmatpush2.msra.mxu0 0.0
        %2278 = vmatprep.subr.mxu0 0.0
        %2279 = vmatpush2.msra.mxu0 0.0
        %2280 = vmatprep.subr.mxu0 0.0
        %2281 = vmatpush2.msra.mxu0 0.0
        %2282 = vmatprep.subr.mxu0 0.0
        %2283 = vmatpush2.msra.mxu0 0.0
        %2284 = vmatprep.subr.mxu0 0.0
        %2285 = vmatpush2.msra.mxu0 0.0
        %2286 = vmatprep.mubr.f32.mxu0 0.0
        %v2287 = vand.u32 %v179, 4294901760
        %v2288 = vsub.f32 %v179, %v2287
        %v2289 = vand.u32 %v2288, 4294901760
        %2290 = vmatmul.mubr.f32.gmra.mxu0 %v2289
        %v2291 = vpop.f32.mrf.mxu0
        %v2292 = vadd.f32 %v2182, %v2291
        %v2293 = vpop.f32.mrf.mxu0
        %2294 = vmatprep.mubr.f32.mxu0 0.0
        %v2295 = vand.u32 %v180, 4294901760
        %v2296 = vsub.f32 %v180, %v2295
        %v2297 = vand.u32 %v2296, 4294901760
        %2298 = vmatmul.mubr.f32.gmra.mxu0 %v2297
        %v2299 = vpop.f32.mrf.mxu0
        %v2300 = vadd.f32 %v2189, %v2299
        %v2301 = vpop.f32.mrf.mxu0
        %2302 = vmatprep.mubr.f32.mxu0 0.0
        %v2303 = vand.u32 %v181, 4294901760
        %v2304 = vsub.f32 %v181, %v2303
        %v2305 = vand.u32 %v2304, 4294901760
        %2306 = vmatmul.mubr.f32.gmra.mxu0 %v2305
        %v2307 = vpop.f32.mrf.mxu0
        %v2308 = vadd.f32 %v2196, %v2307
        %v2309 = vpop.f32.mrf.mxu0
        %2310 = vmatprep.mubr.f32.mxu0 0.0
        %v2311 = vand.u32 %v182, 4294901760
        %v2312 = vsub.f32 %v182, %v2311
        %v2313 = vand.u32 %v2312, 4294901760
        %2314 = vmatmul.mubr.f32.gmra.mxu0 %v2313
        %v2315 = vpop.f32.mrf.mxu0
        %v2316 = vadd.f32 %v2203, %v2315
        %v2317 = vpop.f32.mrf.mxu0
        %2318 = vdwg.mxu0
        %2319 = vmatprep.subr.mxu0 0.0
        %v2320 = vand.u32 %v198, 4294901760
        %v2321 = vsub.f32 %v198, %v2320
        %v2322 = vand.u32 %v2321, 4294901760
        %2323 = vmatpush1.msra.mxu0 %v2322
        %2324 = vmatprep.subr.mxu0 0.0
        %v2325 = vand.u32 %v197, 4294901760
        %v2326 = vsub.f32 %v197, %v2325
        %v2327 = vand.u32 %v2326, 4294901760
        %2328 = vmatpush1.msra.mxu0 %v2327
        %2329 = vmatprep.subr.mxu0 0.0
        %v2330 = vand.u32 %v196, 4294901760
        %v2331 = vsub.f32 %v196, %v2330
        %v2332 = vand.u32 %v2331, 4294901760
        %2333 = vmatpush1.msra.mxu0 %v2332
        %2334 = vmatprep.subr.mxu0 0.0
        %v2335 = vand.u32 %v195, 4294901760
        %v2336 = vsub.f32 %v195, %v2335
        %v2337 = vand.u32 %v2336, 4294901760
        %2338 = vmatpush1.msra.mxu0 %v2337
        %2339 = vmatprep.subr.mxu0 0.0
        %v2340 = vand.u32 %v194, 4294901760
        %v2341 = vsub.f32 %v194, %v2340
        %v2342 = vand.u32 %v2341, 4294901760
        %2343 = vmatpush1.msra.mxu0 %v2342
        %2344 = vmatprep.subr.mxu0 0.0
        %v2345 = vand.u32 %v193, 4294901760
        %v2346 = vsub.f32 %v193, %v2345
        %v2347 = vand.u32 %v2346, 4294901760
        %2348 = vmatpush1.msra.mxu0 %v2347
        %2349 = vmatprep.subr.mxu0 0.0
        %v2350 = vand.u32 %v192, 4294901760
        %v2351 = vsub.f32 %v192, %v2350
        %v2352 = vand.u32 %v2351, 4294901760
        %2353 = vmatpush1.msra.mxu0 %v2352
        %2354 = vmatprep.subr.mxu0 0.0
        %v2355 = vand.u32 %v191, 4294901760
        %v2356 = vsub.f32 %v191, %v2355
        %v2357 = vand.u32 %v2356, 4294901760
        %2358 = vmatpush1.msra.mxu0 %v2357
        %2359 = vmatprep.subr.mxu0 0.0
        %v2360 = vand.u32 %v190, 4294901760
        %v2361 = vsub.f32 %v190, %v2360
        %v2362 = vand.u32 %v2361, 4294901760
        %2363 = vmatpush1.msra.mxu0 %v2362
        %2364 = vmatprep.subr.mxu0 0.0
        %v2365 = vand.u32 %v189, 4294901760
        %v2366 = vsub.f32 %v189, %v2365
        %v2367 = vand.u32 %v2366, 4294901760
        %2368 = vmatpush1.msra.mxu0 %v2367
        %2369 = vmatprep.subr.mxu0 0.0
        %v2370 = vand.u32 %v188, 4294901760
        %v2371 = vsub.f32 %v188, %v2370
        %v2372 = vand.u32 %v2371, 4294901760
        %2373 = vmatpush1.msra.mxu0 %v2372
        %2374 = vmatprep.subr.mxu0 0.0
        %v2375 = vand.u32 %v187, 4294901760
        %v2376 = vsub.f32 %v187, %v2375
        %v2377 = vand.u32 %v2376, 4294901760
        %2378 = vmatpush1.msra.mxu0 %v2377
        %2379 = vmatprep.subr.mxu0 0.0
        %v2380 = vand.u32 %v186, 4294901760
        %v2381 = vsub.f32 %v186, %v2380
        %v2382 = vand.u32 %v2381, 4294901760
        %2383 = vmatpush1.msra.mxu0 %v2382
        %2384 = vmatprep.subr.mxu0 0.0
        %v2385 = vand.u32 %v185, 4294901760
        %v2386 = vsub.f32 %v185, %v2385
        %v2387 = vand.u32 %v2386, 4294901760
        %2388 = vmatpush1.msra.mxu0 %v2387
        %2389 = vmatprep.subr.mxu0 0.0
        %v2390 = vand.u32 %v184, 4294901760
        %v2391 = vsub.f32 %v184, %v2390
        %v2392 = vand.u32 %v2391, 4294901760
        %2393 = vmatpush1.msra.mxu0 %v2392
        %2394 = vmatprep.subr.mxu0 0.0
        %v2395 = vand.u32 %v183, 4294901760
        %v2396 = vsub.f32 %v183, %v2395
        %v2397 = vand.u32 %v2396, 4294901760
        %2398 = vmatpush1.msra.mxu0 %v2397
        %2399 = vmatprep.subr.mxu0 0.0
        %2400 = vmatpush2.msra.mxu0 0.0
        %2401 = vmatprep.subr.mxu0 0.0
        %2402 = vmatpush2.msra.mxu0 0.0
        %2403 = vmatprep.subr.mxu0 0.0
        %2404 = vmatpush2.msra.mxu0 0.0
        %2405 = vmatprep.subr.mxu0 0.0
        %2406 = vmatpush2.msra.mxu0 0.0
        %2407 = vmatprep.subr.mxu0 0.0
        %2408 = vmatpush2.msra.mxu0 0.0
        %2409 = vmatprep.subr.mxu0 0.0
        %2410 = vmatpush2.msra.mxu0 0.0
        %2411 = vmatprep.subr.mxu0 0.0
        %2412 = vmatpush2.msra.mxu0 0.0
        %2413 = vmatprep.subr.mxu0 0.0
        %2414 = vmatpush2.msra.mxu0 0.0
        %2415 = vmatprep.subr.mxu0 0.0
        %2416 = vmatpush2.msra.mxu0 0.0
        %2417 = vmatprep.subr.mxu0 0.0
        %2418 = vmatpush2.msra.mxu0 0.0
        %2419 = vmatprep.subr.mxu0 0.0
        %2420 = vmatpush2.msra.mxu0 0.0
        %2421 = vmatprep.subr.mxu0 0.0
        %2422 = vmatpush2.msra.mxu0 0.0
        %2423 = vmatprep.subr.mxu0 0.0
        %2424 = vmatpush2.msra.mxu0 0.0
        %2425 = vmatprep.subr.mxu0 0.0
        %2426 = vmatpush2.msra.mxu0 0.0
        %2427 = vmatprep.subr.mxu0 0.0
        %2428 = vmatpush2.msra.mxu0 0.0
        %2429 = vmatprep.subr.mxu0 0.0
        %2430 = vmatpush2.msra.mxu0 0.0
        %2431 = vmatprep.mubr.f32.mxu0 0.0
        %v2432 = vand.u32 %v179, 4294901760
        %2433 = vmatmul.mubr.f32.gmra.mxu0 %v2432
        %v2434 = vpop.f32.mrf.mxu0
        %v2435 = vadd.f32 %v2292, %v2434
        %v2436 = vpop.f32.mrf.mxu0
        %2437 = vmatprep.mubr.f32.mxu0 0.0
        %v2438 = vand.u32 %v180, 4294901760
        %2439 = vmatmul.mubr.f32.gmra.mxu0 %v2438
        %v2440 = vpop.f32.mrf.mxu0
        %v2441 = vadd.f32 %v2300, %v2440
        %v2442 = vpop.f32.mrf.mxu0
        %2443 = vmatprep.mubr.f32.mxu0 0.0
        %v2444 = vand.u32 %v181, 4294901760
        %2445 = vmatmul.mubr.f32.gmra.mxu0 %v2444
        %v2446 = vpop.f32.mrf.mxu0
        %v2447 = vadd.f32 %v2308, %v2446
        %v2448 = vpop.f32.mrf.mxu0
        %2449 = vmatprep.mubr.f32.mxu0 0.0
        %v2450 = vand.u32 %v182, 4294901760
        %2451 = vmatmul.mubr.f32.gmra.mxu0 %v2450
        %v2452 = vpop.f32.mrf.mxu0
        %v2453 = vadd.f32 %v2316, %v2452
        %v2454 = vpop.f32.mrf.mxu0
        %2455 = vdwg.mxu0
        %2456 = vmatprep.subr.mxu0 0.0
        %v2457 = vand.u32 %v198, 4294901760
        %2458 = vmatpush1.msra.mxu0 %v2457
        %2459 = vmatprep.subr.mxu0 0.0
        %v2460 = vand.u32 %v197, 4294901760
        %2461 = vmatpush1.msra.mxu0 %v2460
        %2462 = vmatprep.subr.mxu0 0.0
        %v2463 = vand.u32 %v196, 4294901760
        %2464 = vmatpush1.msra.mxu0 %v2463
        %2465 = vmatprep.subr.mxu0 0.0
        %v2466 = vand.u32 %v195, 4294901760
        %2467 = vmatpush1.msra.mxu0 %v2466
        %2468 = vmatprep.subr.mxu0 0.0
        %v2469 = vand.u32 %v194, 4294901760
        %2470 = vmatpush1.msra.mxu0 %v2469
        %2471 = vmatprep.subr.mxu0 0.0
        %v2472 = vand.u32 %v193, 4294901760
        %2473 = vmatpush1.msra.mxu0 %v2472
        %2474 = vmatprep.subr.mxu0 0.0
        %v2475 = vand.u32 %v192, 4294901760
        %2476 = vmatpush1.msra.mxu0 %v2475
        %2477 = vmatprep.subr.mxu0 0.0
        %v2478 = vand.u32 %v191, 4294901760
        %2479 = vmatpush1.msra.mxu0 %v2478
        %2480 = vmatprep.subr.mxu0 0.0
        %v2481 = vand.u32 %v190, 4294901760
        %2482 = vmatpush1.msra.mxu0 %v2481
        %2483 = vmatprep.subr.mxu0 0.0
        %v2484 = vand.u32 %v189, 4294901760
        %2485 = vmatpush1.msra.mxu0 %v2484
        %2486 = vmatprep.subr.mxu0 0.0
        %v2487 = vand.u32 %v188, 4294901760
        %2488 = vmatpush1.msra.mxu0 %v2487
        %2489 = vmatprep.subr.mxu0 0.0
        %v2490 = vand.u32 %v187, 4294901760
        %2491 = vmatpush1.msra.mxu0 %v2490
        %2492 = vmatprep.subr.mxu0 0.0
        %v2493 = vand.u32 %v186, 4294901760
        %2494 = vmatpush1.msra.mxu0 %v2493
        %2495 = vmatprep.subr.mxu0 0.0
        %v2496 = vand.u32 %v185, 4294901760
        %2497 = vmatpush1.msra.mxu0 %v2496
        %2498 = vmatprep.subr.mxu0 0.0
        %v2499 = vand.u32 %v184, 4294901760
        %2500 = vmatpush1.msra.mxu0 %v2499
        %2501 = vmatprep.subr.mxu0 0.0
        %v2502 = vand.u32 %v183, 4294901760
        %2503 = vmatpush1.msra.mxu0 %v2502
        %2504 = vmatprep.subr.mxu0 0.0
        %2505 = vmatpush2.msra.mxu0 0.0
        %2506 = vmatprep.subr.mxu0 0.0
        %2507 = vmatpush2.msra.mxu0 0.0
        %2508 = vmatprep.subr.mxu0 0.0
        %2509 = vmatpush2.msra.mxu0 0.0
        %2510 = vmatprep.subr.mxu0 0.0
        %2511 = vmatpush2.msra.mxu0 0.0
        %2512 = vmatprep.subr.mxu0 0.0
        %2513 = vmatpush2.msra.mxu0 0.0
        %2514 = vmatprep.subr.mxu0 0.0
        %2515 = vmatpush2.msra.mxu0 0.0
        %2516 = vmatprep.subr.mxu0 0.0
        %2517 = vmatpush2.msra.mxu0 0.0
        %2518 = vmatprep.subr.mxu0 0.0
        %2519 = vmatpush2.msra.mxu0 0.0
        %2520 = vmatprep.subr.mxu0 0.0
        %2521 = vmatpush2.msra.mxu0 0.0
        %2522 = vmatprep.subr.mxu0 0.0
        %2523 = vmatpush2.msra.mxu0 0.0
        %2524 = vmatprep.subr.mxu0 0.0
        %2525 = vmatpush2.msra.mxu0 0.0
        %2526 = vmatprep.subr.mxu0 0.0
        %2527 = vmatpush2.msra.mxu0 0.0
        %2528 = vmatprep.subr.mxu0 0.0
        %2529 = vmatpush2.msra.mxu0 0.0
        %2530 = vmatprep.subr.mxu0 0.0
        %2531 = vmatpush2.msra.mxu0 0.0
        %2532 = vmatprep.subr.mxu0 0.0
        %2533 = vmatpush2.msra.mxu0 0.0
        %2534 = vmatprep.subr.mxu0 0.0
        %2535 = vmatpush2.msra.mxu0 0.0
        %2536 = vmatprep.mubr.f32.mxu0 0.0
        %v2537 = vand.u32 %v179, 4294901760
        %2538 = vmatmul.mubr.f32.gmra.mxu0 %v2537
        %v2539 = vpop.f32.mrf.mxu0
        %v2540 = vadd.f32 %v2435, %v2539
        %v2541 = vpop.f32.mrf.mxu0
        %2542 = vmatprep.mubr.f32.mxu0 0.0
        %v2543 = vand.u32 %v180, 4294901760
        %2544 = vmatmul.mubr.f32.gmra.mxu0 %v2543
        %v2545 = vpop.f32.mrf.mxu0
        %v2546 = vadd.f32 %v2441, %v2545
        %v2547 = vpop.f32.mrf.mxu0
        %2548 = vmatprep.mubr.f32.mxu0 0.0
        %v2549 = vand.u32 %v181, 4294901760
        %2550 = vmatmul.mubr.f32.gmra.mxu0 %v2549
        %v2551 = vpop.f32.mrf.mxu0
        %v2552 = vadd.f32 %v2447, %v2551
        %v2553 = vpop.f32.mrf.mxu0
        %2554 = vmatprep.mubr.f32.mxu0 0.0
        %v2555 = vand.u32 %v182, 4294901760
        %2556 = vmatmul.mubr.f32.gmra.mxu0 %v2555
        %v2557 = vpop.f32.mrf.mxu0
        %v2558 = vadd.f32 %v2453, %v2557
        %v2559 = vpop.f32.mrf.mxu0
        %2560 = vdwg.mxu0
        %v2561 = vmul.f32 %v179, 16.0
        %v2562 = vmul.f32 %v180, 16.0
        %v2563 = vmul.f32 %v181, 16.0
        %v2564 = vmul.f32 %v182, 16.0
        %v2565 = vsub.f32 %v2540, %v2561
        %v2566 = vsub.f32 %v2546, %v2562
        %v2567 = vsub.f32 %v2552, %v2563
        %v2568 = vsub.f32 %v2558, %v2564
        %v2569 = vmul.f32 %v1784, %v2565
        %v2570 = vmul.f32 %v1786, %v2566
        %v2571 = vmul.f32 %v1788, %v2567
        %v2572 = vmul.f32 %v1790, %v2568
        %v2573 = vmul.f32 %v2569, 0.06666667
        %v2574 = vmul.f32 %v2570, 0.06666667
        %v2575 = vmul.f32 %v2571, 0.06666667
        %v2576 = vmul.f32 %v2572, 0.06666667
        %v2577 = vadd.f32 %v179, %v2573
        %v2578 = vadd.f32 %v180, %v2574
        %v2579 = vadd.f32 %v181, %v2575
        %v2580 = vadd.f32 %v182, %v2576
        %2581 = vst [vmem:[%s176] sm:$0xff] %v2577
        %2582 = vst [vmem:[%s176 + $0x8] sm:$0xff] %v2578
        %2583 = vst [vmem:[%s176 + $0x10] sm:$0xff] %v2579
        %2584 = vst [vmem:[%s176 + $0x18] sm:$0xff] %v2580
        %s2585 = sand.u32 %s75, 1
        %s2586 = scalar_lea.sflag [#allocation4], %s2585
        %s2587 = sand.u32 %s75, 1
        %s2588 = smul.addr %s2587, 32
        %s2589 = scalar_lea.vmem [#allocation7], %s2588
        // Predicated region
        $region37: #{tpu_custom_call.1} parent=27 // pred_check
          %p2590 = pneg %p85
        $region38: #{tpu_custom_call.1} parent=27 // pred_check_branch
          %2592 = sbr.rel (%p2590) target = $region40
        $region39: #{tpu_custom_call.1} parent=27 // pred_region
          %s2593 = smul.u32 4, %s20
          %s2595 = ssub.s32 512, 512
          %2596 = vsyncadd %s2586, %s2595
          %s2597 = smul.addr %s2593, 128
          %s2598 = scalar_lea.hbm %s2, %s2597
          %s2599 = sshll.u32 %s2589, 4
          %s2600 = int_to_ptr.vmem [resolvable:$true] %s2599
          %2605 = dma.vmem_to_hbm [thread:$0]  %s2600, 512, %s2598, %s2586, 128, 128, 8
        $region40: #{tpu_custom_call.1} parent=27 // pred_fallthru
          _
      $region28: #{tpu_custom_call.1} parent=5 // pred_fallthru
        _
      %p2606 = scmp.le.s32.totalorder 2, %s15
      // Predicated region
      $region41: #{tpu_custom_call.1} parent=5 // pred_check
        %p2607 = pneg %p2606
      $region42: #{tpu_custom_call.1} parent=5 // pred_check_branch
        %2609 = sbr.rel (%p2607) target = $region44
      $region43: #{tpu_custom_call.1} parent=5 // pred_region
        %s2610 = ssub.s32 %s15, 2
        // Predicated region
        $region45: #{tpu_custom_call.1} parent=43 // pred_check
          %p2611 = pneg %p91
        $region46: #{tpu_custom_call.1} parent=43 // pred_check_branch
          %2613 = sbr.rel (%p2611) target = $region48
        $region47: #{tpu_custom_call.1} parent=43 // pred_region
          %s2614 = sand.u32 %s76, 1
          %s2615 = scalar_lea.sflag [#allocation4], %s2614
          %s2616 = sand.u32 %s76, 1
          %s2617 = smul.addr %s2616, 32
          %s2618 = scalar_lea.vmem [#allocation7], %s2617
          %2619 = dma.done %s2615, 512
        $region48: #{tpu_custom_call.1} parent=43 // pred_fallthru
          _
      $region44: #{tpu_custom_call.1} parent=5 // pred_fallthru
        _
    $region6: #{tpu_custom_call.1} parent=1 // loop_footer
      %s19 = sadd.s32 1, %s15
    $region7: #{tpu_custom_call.1} parent=1 // loop_footer_branch
      %14 = sbr.rel target = $region3
    $region8: #{tpu_custom_call.1} parent=1 // loop_exit
      _
    %2620 = vsyncpa [#allocation3], 1
    %s2621 = scalar_lea.sflag [#allocation3], 1
    %2622 = vsyncpa %s2621, 1
    %2623 = vsyncpa [#allocation6], 1
    %2624 = vsyncpa [#allocation4], 1
    %s2625 = scalar_lea.sflag [#allocation4], 1
    %2626 = vsyncpa %s2625, 1

</llo_original>
